<compile_context>
chip_gen: v7x
topology: tpu7x:2x2x1
jax: 0.10.0
libtpu: 0.0.40
codegen_flags: <defaults>
</compile_context>

<pallas_src>
import jax
import jax.numpy as jnp
import numpy as np
from jax.experimental import pallas as pl
from jax.experimental.pallas import tpu as pltpu


# --------------------------------------------------------------------------------------
# Kernel
# --------------------------------------------------------------------------------------
def build_kernel(ne, ns, d, dimD, nE, nS):
    """ne / ns = number of Linear layers in the energy / entropy nets (>= 2 each)."""
    dd = d * d
    dm = d * dimD

    def kernel(*refs):
        it = iter(refs)
        y = next(it)[...]                               # (B, d)
        w0cat = next(it)[...]                           # (d, nE+nS) fused first layers
        b0cat = next(it)[...]                           # (1, nE+nS)
        WeF = [next(it)[...] for _ in range(ne - 2)]    # energy fwd mids (in, out)
        beF = [next(it)[...] for _ in range(ne - 2)]    # (1, out)
        WeB = [next(it)[...] for _ in range(ne - 1)]    # energy bwd, torch layout, layers 1..ne-1
        WsF = [next(it)[...] for _ in range(ns - 2)]    # entropy fwd mids
        bsF = [next(it)[...] for _ in range(ns - 2)]
        WsB = [next(it)[...] for _ in range(ns - 1)]    # entropy bwd, layers 1..ns-1
        wbE_big = next(it)[...]                         # (nE, dd+dm): [rep_d(We0) | rep_dimD(We0)]
        wbS_big = next(it)[...]                         # (nS, dd)   : tile_d(Ws0)
        w_escat = next(it)[...]                         # (dd, d+dimD): [xi_flat | Lu_flat]
        tilu = next(it)[...]                            # (dimD, dm) : 0/1 lane-tile matrix
        ldt = next(it)[...]                             # (dm, d)    : LD flattened
        out_ref = next(it)                              # (B, d)

        B = y.shape[0]
        f32 = jnp.float32

        # ---- forward pass of both MLPs; first layers fused into ONE matmul ----
        a0 = jnp.tanh(jnp.dot(y, w0cat, preferred_element_type=f32) + b0cat)
        actsE = [a0[:, :nE]]
        actsS = [a0[:, nE:]]
        h = actsE[0]
        for i in range(ne - 2):
            h = jnp.tanh(jnp.dot(h, WeF[i], preferred_element_type=f32) + beF[i])
            actsE.append(h)
        h = actsS[0]
        for i in range(ns - 2):
            h = jnp.tanh(jnp.dot(h, WsF[i], preferred_element_type=f32) + bsF[i])
            actsS.append(h)

        # ---- analytic backward (scalar-output nets), stop before the input-layer matmul
        gE = jnp.broadcast_to(WeB[ne - 2], (B, WeB[ne - 2].shape[1]))
        for i in range(ne - 1, 1, -1):
            a = actsE[i - 1]
            gE = gE * (1.0 - a * a)                     # tanh'
            gE = jnp.dot(gE, WeB[i - 2], preferred_element_type=f32)
        gE = gE * (1.0 - actsE[0] * actsE[0])

        gS = jnp.broadcast_to(WsB[ns - 2], (B, WsB[ns - 2].shape[1]))
        for i in range(ns - 1, 1, -1):
            a = actsS[i - 1]
            gS = gS * (1.0 - a * a)
            gS = jnp.dot(gS, WsB[i - 2], preferred_element_type=f32)
        gS = gS * (1.0 - actsS[0] * actsS[0])

        # ---- final backward matmuls fused with the outer-product lane expansion ----
        # eparts[:, b*d+c]     = dE_b   (repeat over c)     [cols 0..dd)
        # eparts[:, dd+b*dimD+m] = dE_b (repeat over m)      [cols dd..dd+dm)
        # til_dS[:, b*d+c]     = dS_c   (tile over b)
        eparts = jnp.dot(gE, wbE_big, preferred_element_type=f32)   # (B, dd+dm)
        rep_dE = eparts[:, :dd]
        repm_dE = eparts[:, dd:]
        til_dS = jnp.dot(gS, wbS_big, preferred_element_type=f32)   # (B, dd)

        # ---- GENERIC contractions: lane-dense, no loops, no masked stores ----
        outer_es = rep_dE * til_dS                                   # dE_b * dS_c at [b*d+c]
        r = jnp.dot(outer_es, w_escat, preferred_element_type=f32)   # (B, d+dimD)
        ld_e = r[:, :d]                                              # Poisson term L dE
        u = r[:, d:]                                                 # u_n = sum L[c,b,n] dS_c dE_b
        til_u = jnp.dot(u, tilu, preferred_element_type=f32)         # u_m at [b*dimD+m]
        outer_eu = repm_dE * til_u                                   # dE_b * u_m
        md_s = jnp.dot(outer_eu, ldt, preferred_element_type=f32)    # friction term M dS

        out_ref[...] = (ld_e + md_s).astype(out_ref.dtype)           # single full-width store

    return kernel


# --------------------------------------------------------------------------------------
# One-time parameter packing (hoisted out of the per-RHS-call hot path)
# --------------------------------------------------------------------------------------
def pack_generic_params(params):
    We, be = params["energy_W"], params["energy_b"]      # torch layout (out, in), (out,)
    Ws, bs = params["entropy_W"], params["entropy_b"]
    xi = params["poisson_xi"].astype(jnp.float32)
    fL = params["friction_L"].astype(jnp.float32)
    fD = params["friction_D"].astype(jnp.float32)

    d = xi.shape[0]
    dimD = fD.shape[0]
    dd, dm = d * d, d * dimD

    xi_sym = (xi - jnp.transpose(xi, (0, 2, 1)) + jnp.transpose(xi, (1, 2, 0))
              - jnp.transpose(xi, (1, 0, 2)) + jnp.transpose(xi, (2, 0, 1))
              - jnp.transpose(xi, (2, 1, 0))) / 6.0
    L = (fL - jnp.transpose(fL, (1, 0, 2))) / 2.0
    Dmat = fD @ fD.T
    LD = jnp.einsum('abm,mn->abn', L, Dmat)              # fold D into L once

    xiT = jnp.reshape(xi_sym, (d, dd)).T                             # [b*d+c, a] = xi_sym[a,b,c]
    LuT = jnp.reshape(jnp.transpose(L, (1, 0, 2)), (dd, dimD))       # [b*d+c, n] = L[c,b,n]
    w_escat = jnp.concatenate([xiT, LuT], axis=1)                    # (dd, d+dimD)
    ldt = jnp.reshape(jnp.transpose(LD, (1, 2, 0)), (dm, d))         # [b*dimD+n, a] = LD[a,b,n]
    tilu = jnp.tile(jnp.eye(dimD, dtype=jnp.float32), (1, d))        # [m, b*dimD+m'] = delta

    W0e, W0s = We[0], Ws[0]                                          # (nE, d), (nS, d)
    w0cat = jnp.concatenate([W0e.T, W0s.T], axis=1)                  # (d, nE+nS)
    b0cat = jnp.concatenate([be[0], bs[0]]).reshape(1, -1)           # (1, nE+nS)

    # final-backward weights pre-expanded so gE/gS matmuls directly emit the
    # repeated/tiled dE and dS lane layouts needed for the outer products.
    wbE_big = jnp.concatenate([jnp.repeat(W0e, d, axis=1),           # [k, b*d+c]     = W0e[k,b]
                               jnp.repeat(W0e, dimD, axis=1)],       # [k, b*dimD+m]  = W0e[k,b]
                              axis=1)                                # (nE, dd+dm)
    wbS_big = jnp.tile(W0s, (1, d))                                  # [k, b*d+c] = W0s[k,c]; (nS, dd)

    return dict(
        w0cat=w0cat, b0cat=b0cat,
        WeF=[We[k].T for k in range(1, len(We) - 1)],
        beF=[be[k].reshape(1, -1) for k in range(1, len(We) - 1)],
        WeB=[We[k] for k in range(1, len(We))],
        WsF=[Ws[k].T for k in range(1, len(Ws) - 1)],
        bsF=[bs[k].reshape(1, -1) for k in range(1, len(Ws) - 1)],
        WsB=[Ws[k] for k in range(1, len(Ws))],
        wbE_big=wbE_big, wbS_big=wbS_big,
        w_escat=w_escat, tilu=tilu, ldt=ldt,
    )


# --------------------------------------------------------------------------------------
# Forward wrappers
# --------------------------------------------------------------------------------------
def _rhs(y, packed):
    batch, d = y.shape
    nE = packed["wbE_big"].shape[0]
    nS = packed["wbS_big"].shape[0]
    dimD = packed["tilu"].shape[0]
    ne = len(packed["WeB"]) + 1
    ns = len(packed["WsB"]) + 1

    # batch-blocked grid: single block at small batch; sharded across TensorCores
    # (v7x megacore) when the batch grows.
    block_b = 256 if (batch > 256 and batch % 256 == 0) else batch
    grid = (batch // block_b,)

    weights = ([packed["w0cat"], packed["b0cat"]]
               + list(packed["WeF"]) + list(packed["beF"]) + list(packed["WeB"])
               + list(packed["WsF"]) + list(packed["bsF"]) + list(packed["WsB"])
               + [packed["wbE_big"], packed["wbS_big"],
                  packed["w_escat"], packed["tilu"], packed["ldt"]])

    kernel = build_kernel(ne, ns, d, dimD, nE, nS)

    in_specs = ([pl.BlockSpec((block_b, d), lambda i: (i, 0))]
                + [pl.BlockSpec(tuple(w.shape), lambda i: (0, 0)) for w in weights])
    out_specs = pl.BlockSpec((block_b, d), lambda i: (i, 0))

    return pl.pallas_call(
        kernel,
        out_shape=jax.ShapeDtypeStruct((batch, d), jnp.float32),
        grid_spec=pltpu.PrefetchScalarGridSpec(
            num_scalar_prefetch=0, grid=grid,
            in_specs=in_specs, out_specs=out_specs),
        compiler_params=pltpu.CompilerParams(
            dimension_semantics=("parallel",)),
    )(y, *weights)


odefunc_generic_rhs = jax.jit(_rhs)


def odefunc_forward(t_local, y, packed, backwards=False):
    """Matches ODEFunc_.forward: gradient net applied to y; t is unused."""
    del t_local
    grad = odefunc_generic_rhs(y, packed)
    return -grad if backwards else grad


# ------------------------- pure-JAX reference (for checking) -------------------------
def _mlp_apply(x, Ws, bs):
    h = x @ Ws[0].T + bs[0]
    for i in range(1, len(Ws)):
        h = jnp.tanh(h)
        h = h @ Ws[i].T + bs[i]
    return h


def reference_forward(y, params):
    dE = jax.grad(lambda yy: _mlp_apply(yy, params["energy_W"], params["energy_b"]).sum())(y)
    dS = jax.grad(lambda yy: _mlp_apply(yy, params["entropy_W"], params["entropy_b"]).sum())(y)
    xi = params["poisson_xi"]
    xi_sym = (xi - jnp.transpose(xi, (0, 2, 1)) + jnp.transpose(xi, (1, 2, 0))
              - jnp.transpose(xi, (1, 0, 2)) + jnp.transpose(xi, (2, 0, 1))
              - jnp.transpose(xi, (2, 1, 0))) / 6.0
    LdE = jnp.einsum('abc,zb,zc->za', xi_sym, dE, dS)
    D = params["friction_D"] @ params["friction_D"].T
    L = (params["friction_L"] - jnp.transpose(params["friction_L"], (1, 0, 2))) / 2.0
    zeta = jnp.einsum('abm,mn,cdn->abcd', L, D, L)
    MdS = jnp.einsum('abmn,zb,zm,zn->za', zeta, dE, dS, dE)
    return LdE + MdS


# ------------------------------- deterministic init -------------------------------
def init_params(key, output_dim, D1, D2, lE, nE, lS, nS):
    def mlp_params(k, n_in, n_out, n_layers, n_units):
        dims = [n_in] + [n_units] * (n_layers + 1) + [n_out]
        Ws, bs = [], []
        keys = jax.random.split(k, 2 * (len(dims) - 1))
        for i in range(len(dims) - 1):
            fan_in, fan_out = dims[i], dims[i + 1]
            W = jax.random.normal(keys[2 * i], (fan_out, fan_in), jnp.float32) / jnp.sqrt(
                jnp.float32(fan_in))
            b = 0.1 * jax.random.normal(keys[2 * i + 1], (fan_out,), jnp.float32)
            Ws.append(W)
            bs.append(b)
        return Ws, bs

    k = jax.random.split(key, 5)
    eW, eb = mlp_params(k[0], output_dim, 1, lE, nE)
    sW, sb = mlp_params(k[1], output_dim, 1, lS, nS)
    return dict(
        energy_W=eW, energy_b=eb, entropy_W=sW, entropy_b=sb,
        friction_D=jax.random.normal(k[2], (D1, D2), jnp.float32),
        friction_L=jax.random.normal(k[3], (output_dim, output_dim, D1), jnp.float32),
        poisson_xi=jax.random.normal(k[4], (output_dim, output_dim, output_dim), jnp.float32),
    )


if __name__ == "__main__":
    output_dim, D1, D2, lE, nE, lS, nS = 8, 4, 6, 2, 32, 1, 16
    batch = 8

    key = jax.random.PRNGKey(0)
    kp, ky = jax.random.split(key)
    params = init_params(kp, output_dim, D1, D2, lE, nE, lS, nS)
    y = jax.random.normal(ky, (batch, output_dim), dtype=jnp.float32)

    # one-time packing (hoisted out of the ODE integration hot path)
    packed = pack_generic_params(params)

    out = odefunc_forward(0.0, y, packed)
    out = jax.block_until_ready(out)

    ref = reference_forward(y, params)
    np.testing.assert_allclose(np.asarray(out), np.asarray(ref), rtol=2e-2, atol=2e-2)

    print("KERNEL_OK")
</pallas_src>

<mosaic_0001>
module attributes {stable_mosaic.version = 11 : i64} {
  func.func @kernel(%arg0: i32, %arg1: memref<8x8xf32, #tpu.memory_space<vmem>>, %arg2: memref<8x48xf32, #tpu.memory_space<vmem>>, %arg3: memref<1x48xf32, #tpu.memory_space<vmem>>, %arg4: memref<32x32xf32, #tpu.memory_space<vmem>>, %arg5: memref<32x32xf32, #tpu.memory_space<vmem>>, %arg6: memref<1x32xf32, #tpu.memory_space<vmem>>, %arg7: memref<1x32xf32, #tpu.memory_space<vmem>>, %arg8: memref<32x32xf32, #tpu.memory_space<vmem>>, %arg9: memref<32x32xf32, #tpu.memory_space<vmem>>, %arg10: memref<1x32xf32, #tpu.memory_space<vmem>>, %arg11: memref<16x16xf32, #tpu.memory_space<vmem>>, %arg12: memref<1x16xf32, #tpu.memory_space<vmem>>, %arg13: memref<16x16xf32, #tpu.memory_space<vmem>>, %arg14: memref<1x16xf32, #tpu.memory_space<vmem>>, %arg15: memref<32x96xf32, #tpu.memory_space<vmem>>, %arg16: memref<16x64xf32, #tpu.memory_space<vmem>>, %arg17: memref<64x12xf32, #tpu.memory_space<vmem>>, %arg18: memref<4x32xf32, #tpu.memory_space<vmem>>, %arg19: memref<32x8xf32, #tpu.memory_space<vmem>>, %arg20: memref<8x8xf32, #tpu.memory_space<vmem>>) attributes {dimension_semantics = [#tpu.dimension_semantics<parallel>], iteration_bounds = array<i64: 1>, scalar_prefetch = 0 : i64, scratch_operands = 0 : i64, tpu.core_type = #tpu.core_type<tc>, window_params = [{transform_indices = @transform_0, window_bounds = array<i64: 8, 8>}, {pipeline_mode = #tpu.pipeline_mode<synchronous>, transform_indices = @transform_1, window_bounds = array<i64: 8, 48>}, {pipeline_mode = #tpu.pipeline_mode<synchronous>, transform_indices = @transform_2, window_bounds = array<i64: 1, 48>}, {pipeline_mode = #tpu.pipeline_mode<synchronous>, transform_indices = @transform_3, window_bounds = array<i64: 32, 32>}, {pipeline_mode = #tpu.pipeline_mode<synchronous>, transform_indices = @transform_4, window_bounds = array<i64: 32, 32>}, {pipeline_mode = #tpu.pipeline_mode<synchronous>, transform_indices = @transform_5, window_bounds = array<i64: 1, 32>}, {pipeline_mode = #tpu.pipeline_mode<synchronous>, transform_indices = @transform_6, window_bounds = array<i64: 1, 32>}, {pipeline_mode = #tpu.pipeline_mode<synchronous>, transform_indices = @transform_7, window_bounds = array<i64: 32, 32>}, {pipeline_mode = #tpu.pipeline_mode<synchronous>, transform_indices = @transform_8, window_bounds = array<i64: 32, 32>}, {pipeline_mode = #tpu.pipeline_mode<synchronous>, transform_indices = @transform_9, window_bounds = array<i64: 1, 32>}, {pipeline_mode = #tpu.pipeline_mode<synchronous>, transform_indices = @transform_10, window_bounds = array<i64: 16, 16>}, {pipeline_mode = #tpu.pipeline_mode<synchronous>, transform_indices = @transform_11, window_bounds = array<i64: 1, 16>}, {pipeline_mode = #tpu.pipeline_mode<synchronous>, transform_indices = @transform_12, window_bounds = array<i64: 16, 16>}, {pipeline_mode = #tpu.pipeline_mode<synchronous>, transform_indices = @transform_13, window_bounds = array<i64: 1, 16>}, {pipeline_mode = #tpu.pipeline_mode<synchronous>, transform_indices = @transform_14, window_bounds = array<i64: 32, 96>}, {pipeline_mode = #tpu.pipeline_mode<synchronous>, transform_indices = @transform_15, window_bounds = array<i64: 16, 64>}, {pipeline_mode = #tpu.pipeline_mode<synchronous>, transform_indices = @transform_16, window_bounds = array<i64: 64, 12>}, {pipeline_mode = #tpu.pipeline_mode<synchronous>, transform_indices = @transform_17, window_bounds = array<i64: 4, 32>}, {pipeline_mode = #tpu.pipeline_mode<synchronous>, transform_indices = @transform_18, window_bounds = array<i64: 32, 8>}, {transform_indices = @transform_19, window_bounds = array<i64: 8, 8>}]} {
    %c0 = arith.constant 0 : index
    %c0_0 = arith.constant 0 : index
    %0 = vector.load %arg1[%c0, %c0_0] : memref<8x8xf32, #tpu.memory_space<vmem>>, vector<8x8xf32>
    %c0_1 = arith.constant 0 : index
    %c0_2 = arith.constant 0 : index
    %1 = vector.load %arg2[%c0_1, %c0_2] : memref<8x48xf32, #tpu.memory_space<vmem>>, vector<8x48xf32>
    %c0_3 = arith.constant 0 : index
    %c0_4 = arith.constant 0 : index
    %2 = vector.load %arg3[%c0_3, %c0_4] : memref<1x48xf32, #tpu.memory_space<vmem>>, vector<1x48xf32>
    %c0_5 = arith.constant 0 : index
    %c0_6 = arith.constant 0 : index
    %3 = vector.load %arg4[%c0_5, %c0_6] : memref<32x32xf32, #tpu.memory_space<vmem>>, vector<32x32xf32>
    %c0_7 = arith.constant 0 : index
    %c0_8 = arith.constant 0 : index
    %4 = vector.load %arg5[%c0_7, %c0_8] : memref<32x32xf32, #tpu.memory_space<vmem>>, vector<32x32xf32>
    %c0_9 = arith.constant 0 : index
    %c0_10 = arith.constant 0 : index
    %5 = vector.load %arg6[%c0_9, %c0_10] : memref<1x32xf32, #tpu.memory_space<vmem>>, vector<1x32xf32>
    %c0_11 = arith.constant 0 : index
    %c0_12 = arith.constant 0 : index
    %6 = vector.load %arg7[%c0_11, %c0_12] : memref<1x32xf32, #tpu.memory_space<vmem>>, vector<1x32xf32>
    %c0_13 = arith.constant 0 : index
    %c0_14 = arith.constant 0 : index
    %7 = vector.load %arg8[%c0_13, %c0_14] : memref<32x32xf32, #tpu.memory_space<vmem>>, vector<32x32xf32>
    %c0_15 = arith.constant 0 : index
    %c0_16 = arith.constant 0 : index
    %8 = vector.load %arg9[%c0_15, %c0_16] : memref<32x32xf32, #tpu.memory_space<vmem>>, vector<32x32xf32>
    %c0_17 = arith.constant 0 : index
    %c0_18 = arith.constant 0 : index
    %9 = vector.load %arg10[%c0_17, %c0_18] : memref<1x32xf32, #tpu.memory_space<vmem>>, vector<1x32xf32>
    %c0_19 = arith.constant 0 : index
    %c0_20 = arith.constant 0 : index
    %10 = vector.load %arg11[%c0_19, %c0_20] : memref<16x16xf32, #tpu.memory_space<vmem>>, vector<16x16xf32>
    %c0_21 = arith.constant 0 : index
    %c0_22 = arith.constant 0 : index
    %11 = vector.load %arg12[%c0_21, %c0_22] : memref<1x16xf32, #tpu.memory_space<vmem>>, vector<1x16xf32>
    %c0_23 = arith.constant 0 : index
    %c0_24 = arith.constant 0 : index
    %12 = vector.load %arg13[%c0_23, %c0_24] : memref<16x16xf32, #tpu.memory_space<vmem>>, vector<16x16xf32>
    %c0_25 = arith.constant 0 : index
    %c0_26 = arith.constant 0 : index
    %13 = vector.load %arg14[%c0_25, %c0_26] : memref<1x16xf32, #tpu.memory_space<vmem>>, vector<1x16xf32>
    %c0_27 = arith.constant 0 : index
    %c0_28 = arith.constant 0 : index
    %14 = vector.load %arg15[%c0_27, %c0_28] : memref<32x96xf32, #tpu.memory_space<vmem>>, vector<32x96xf32>
    %c0_29 = arith.constant 0 : index
    %c0_30 = arith.constant 0 : index
    %15 = vector.load %arg16[%c0_29, %c0_30] : memref<16x64xf32, #tpu.memory_space<vmem>>, vector<16x64xf32>
    %c0_31 = arith.constant 0 : index
    %c0_32 = arith.constant 0 : index
    %16 = vector.load %arg17[%c0_31, %c0_32] : memref<64x12xf32, #tpu.memory_space<vmem>>, vector<64x12xf32>
    %c0_33 = arith.constant 0 : index
    %c0_34 = arith.constant 0 : index
    %17 = vector.load %arg18[%c0_33, %c0_34] : memref<4x32xf32, #tpu.memory_space<vmem>>, vector<4x32xf32>
    %c0_35 = arith.constant 0 : index
    %c0_36 = arith.constant 0 : index
    %18 = vector.load %arg19[%c0_35, %c0_36] : memref<32x8xf32, #tpu.memory_space<vmem>>, vector<32x8xf32>
    %cst = arith.constant dense<0.000000e+00> : vector<8x48xf32>
    %19 = tpu.matmul %0, %1, %cst {dimension_numbers = #tpu.dot_dimension_numbers<[1], [0], [0], [1], [0, 0, 1, 1], [], []>} : vector<8x8xf32>, vector<8x48xf32>, vector<8x48xf32> -> vector<8x48xf32>
    %20 = vector.broadcast %2 : vector<1x48xf32> to vector<8x48xf32>
    %21 = arith.addf %19, %20 : vector<8x48xf32>
    %22 = math.tanh %21 : vector<8x48xf32>
    %23 = vector.extract_strided_slice %22 {offsets = [0, 0], sizes = [8, 32], strides = [1, 1]} : vector<8x48xf32> to vector<8x32xf32>
    %24 = vector.extract_strided_slice %22 {offsets = [0, 32], sizes = [8, 16], strides = [1, 1]} : vector<8x48xf32> to vector<8x16xf32>
    %cst_37 = arith.constant dense<0.000000e+00> : vector<8x32xf32>
    %25 = tpu.matmul %23, %3, %cst_37 {dimension_numbers = #tpu.dot_dimension_numbers<[1], [0], [0], [1], [0, 0, 1, 1], [], []>} : vector<8x32xf32>, vector<32x32xf32>, vector<8x32xf32> -> vector<8x32xf32>
    %26 = vector.broadcast %5 : vector<1x32xf32> to vector<8x32xf32>
    %27 = arith.addf %25, %26 : vector<8x32xf32>
    %28 = math.tanh %27 : vector<8x32xf32>
    %cst_38 = arith.constant dense<0.000000e+00> : vector<8x32xf32>
    %29 = tpu.matmul %28, %4, %cst_38 {dimension_numbers = #tpu.dot_dimension_numbers<[1], [0], [0], [1], [0, 0, 1, 1], [], []>} : vector<8x32xf32>, vector<32x32xf32>, vector<8x32xf32> -> vector<8x32xf32>
    %30 = vector.broadcast %6 : vector<1x32xf32> to vector<8x32xf32>
    %31 = arith.addf %29, %30 : vector<8x32xf32>
    %32 = math.tanh %31 : vector<8x32xf32>
    %cst_39 = arith.constant dense<0.000000e+00> : vector<8x16xf32>
    %33 = tpu.matmul %24, %10, %cst_39 {dimension_numbers = #tpu.dot_dimension_numbers<[1], [0], [0], [1], [0, 0, 1, 1], [], []>} : vector<8x16xf32>, vector<16x16xf32>, vector<8x16xf32> -> vector<8x16xf32>
    %34 = vector.broadcast %11 : vector<1x16xf32> to vector<8x16xf32>
    %35 = arith.addf %33, %34 : vector<8x16xf32>
    %36 = math.tanh %35 : vector<8x16xf32>
    %37 = vector.shape_cast %9 : vector<1x32xf32> to vector<1x32xf32>
    %38 = vector.broadcast %37 : vector<1x32xf32> to vector<8x32xf32>
    %39 = arith.mulf %32, %32 : vector<8x32xf32>
    %cst_40 = arith.constant 1.000000e+00 : f32
    %40 = vector.broadcast %cst_40 : f32 to vector<8x32xf32>
    %41 = arith.subf %40, %39 : vector<8x32xf32>
    %42 = arith.mulf %38, %41 : vector<8x32xf32>
    %cst_41 = arith.constant dense<0.000000e+00> : vector<8x32xf32>
    %43 = tpu.matmul %42, %8, %cst_41 {dimension_numbers = #tpu.dot_dimension_numbers<[1], [0], [0], [1], [0, 0, 1, 1], [], []>} : vector<8x32xf32>, vector<32x32xf32>, vector<8x32xf32> -> vector<8x32xf32>
    %44 = arith.mulf %28, %28 : vector<8x32xf32>
    %cst_42 = arith.constant 1.000000e+00 : f32
    %45 = vector.broadcast %cst_42 : f32 to vector<8x32xf32>
    %46 = arith.subf %45, %44 : vector<8x32xf32>
    %47 = arith.mulf %43, %46 : vector<8x32xf32>
    %cst_43 = arith.constant dense<0.000000e+00> : vector<8x32xf32>
    %48 = tpu.matmul %47, %7, %cst_43 {dimension_numbers = #tpu.dot_dimension_numbers<[1], [0], [0], [1], [0, 0, 1, 1], [], []>} : vector<8x32xf32>, vector<32x32xf32>, vector<8x32xf32> -> vector<8x32xf32>
    %49 = arith.mulf %23, %23 : vector<8x32xf32>
    %cst_44 = arith.constant 1.000000e+00 : f32
    %50 = vector.broadcast %cst_44 : f32 to vector<8x32xf32>
    %51 = arith.subf %50, %49 : vector<8x32xf32>
    %52 = arith.mulf %48, %51 : vector<8x32xf32>
    %53 = vector.shape_cast %13 : vector<1x16xf32> to vector<1x16xf32>
    %54 = vector.broadcast %53 : vector<1x16xf32> to vector<8x16xf32>
    %55 = arith.mulf %36, %36 : vector<8x16xf32>
    %cst_45 = arith.constant 1.000000e+00 : f32
    %56 = vector.broadcast %cst_45 : f32 to vector<8x16xf32>
    %57 = arith.subf %56, %55 : vector<8x16xf32>
    %58 = arith.mulf %54, %57 : vector<8x16xf32>
    %cst_46 = arith.constant dense<0.000000e+00> : vector<8x16xf32>
    %59 = tpu.matmul %58, %12, %cst_46 {dimension_numbers = #tpu.dot_dimension_numbers<[1], [0], [0], [1], [0, 0, 1, 1], [], []>} : vector<8x16xf32>, vector<16x16xf32>, vector<8x16xf32> -> vector<8x16xf32>
    %60 = arith.mulf %24, %24 : vector<8x16xf32>
    %cst_47 = arith.constant 1.000000e+00 : f32
    %61 = vector.broadcast %cst_47 : f32 to vector<8x16xf32>
    %62 = arith.subf %61, %60 : vector<8x16xf32>
    %63 = arith.mulf %59, %62 : vector<8x16xf32>
    %cst_48 = arith.constant dense<0.000000e+00> : vector<8x96xf32>
    %64 = tpu.matmul %52, %14, %cst_48 {dimension_numbers = #tpu.dot_dimension_numbers<[1], [0], [0], [1], [0, 0, 1, 1], [], []>} : vector<8x32xf32>, vector<32x96xf32>, vector<8x96xf32> -> vector<8x96xf32>
    %65 = vector.extract_strided_slice %64 {offsets = [0, 0], sizes = [8, 64], strides = [1, 1]} : vector<8x96xf32> to vector<8x64xf32>
    %66 = vector.extract_strided_slice %64 {offsets = [0, 64], sizes = [8, 32], strides = [1, 1]} : vector<8x96xf32> to vector<8x32xf32>
    %cst_49 = arith.constant dense<0.000000e+00> : vector<8x64xf32>
    %67 = tpu.matmul %63, %15, %cst_49 {dimension_numbers = #tpu.dot_dimension_numbers<[1], [0], [0], [1], [0, 0, 1, 1], [], []>} : vector<8x16xf32>, vector<16x64xf32>, vector<8x64xf32> -> vector<8x64xf32>
    %68 = arith.mulf %65, %67 : vector<8x64xf32>
    %cst_50 = arith.constant dense<0.000000e+00> : vector<8x12xf32>
    %69 = tpu.matmul %68, %16, %cst_50 {dimension_numbers = #tpu.dot_dimension_numbers<[1], [0], [0], [1], [0, 0, 1, 1], [], []>} : vector<8x64xf32>, vector<64x12xf32>, vector<8x12xf32> -> vector<8x12xf32>
    %70 = vector.extract_strided_slice %69 {offsets = [0, 0], sizes = [8, 8], strides = [1, 1]} : vector<8x12xf32> to vector<8x8xf32>
    %71 = vector.extract_strided_slice %69 {offsets = [0, 8], sizes = [8, 4], strides = [1, 1]} : vector<8x12xf32> to vector<8x4xf32>
    %cst_51 = arith.constant dense<0.000000e+00> : vector<8x32xf32>
    %72 = tpu.matmul %71, %17, %cst_51 {dimension_numbers = #tpu.dot_dimension_numbers<[1], [0], [0], [1], [0, 0, 1, 1], [], []>} : vector<8x4xf32>, vector<4x32xf32>, vector<8x32xf32> -> vector<8x32xf32>
    %73 = arith.mulf %66, %72 : vector<8x32xf32>
    %cst_52 = arith.constant dense<0.000000e+00> : vector<8x8xf32>
    %74 = tpu.matmul %73, %18, %cst_52 {dimension_numbers = #tpu.dot_dimension_numbers<[1], [0], [0], [1], [0, 0, 1, 1], [], []>} : vector<8x32xf32>, vector<32x8xf32>, vector<8x8xf32> -> vector<8x8xf32>
    %75 = arith.addf %70, %74 : vector<8x8xf32>
    %c0_53 = arith.constant 0 : index
    %c0_54 = arith.constant 0 : index
    %76 = vector.load %arg20[%c0_53, %c0_54] : memref<8x8xf32, #tpu.memory_space<vmem>>, vector<8x8xf32>
    tpu.vector_store %arg20[%c0_53, %c0_54], %75 {strides = array<i32>} : memref<8x8xf32, #tpu.memory_space<vmem>>, vector<8x8xf32>,
    return
  }
  func.func @transform_0(%arg0: i32) -> (i32, i32) {
    %c0_i32 = arith.constant 0 : i32
    %c0_i32_0 = arith.constant 0 : i32
    return %arg0, %c0_i32 : i32, i32
  }
  func.func @transform_1(%arg0: i32) -> (i32, i32) {
    %c0_i32 = arith.constant 0 : i32
    %c0_i32_0 = arith.constant 0 : i32
    %c0_i32_1 = arith.constant 0 : i32
    return %c0_i32, %c0_i32_0 : i32, i32
  }
  func.func @transform_2(%arg0: i32) -> (i32, i32) {
    %c0_i32 = arith.constant 0 : i32
    %c0_i32_0 = arith.constant 0 : i32
    %c0_i32_1 = arith.constant 0 : i32
    return %c0_i32, %c0_i32_0 : i32, i32
  }
  func.func @transform_3(%arg0: i32) -> (i32, i32) {
    %c0_i32 = arith.constant 0 : i32
    %c0_i32_0 = arith.constant 0 : i32
    %c0_i32_1 = arith.constant 0 : i32
    return %c0_i32, %c0_i32_0 : i32, i32
  }
  func.func @transform_4(%arg0: i32) -> (i32, i32) {
    %c0_i32 = arith.constant 0 : i32
    %c0_i32_0 = arith.constant 0 : i32
    %c0_i32_1 = arith.constant 0 : i32
    return %c0_i32, %c0_i32_0 : i32, i32
  }
  func.func @transform_5(%arg0: i32) -> (i32, i32) {
    %c0_i32 = arith.constant 0 : i32
    %c0_i32_0 = arith.constant 0 : i32
    %c0_i32_1 = arith.constant 0 : i32
    return %c0_i32, %c0_i32_0 : i32, i32
  }
  func.func @transform_6(%arg0: i32) -> (i32, i32) {
    %c0_i32 = arith.constant 0 : i32
    %c0_i32_0 = arith.constant 0 : i32
    %c0_i32_1 = arith.constant 0 : i32
    return %c0_i32, %c0_i32_0 : i32, i32
  }
  func.func @transform_7(%arg0: i32) -> (i32, i32) {
    %c0_i32 = arith.constant 0 : i32
    %c0_i32_0 = arith.constant 0 : i32
    %c0_i32_1 = arith.constant 0 : i32
    return %c0_i32, %c0_i32_0 : i32, i32
  }
  func.func @transform_8(%arg0: i32) -> (i32, i32) {
    %c0_i32 = arith.constant 0 : i32
    %c0_i32_0 = arith.constant 0 : i32
    %c0_i32_1 = arith.constant 0 : i32
    return %c0_i32, %c0_i32_0 : i32, i32
  }
  func.func @transform_9(%arg0: i32) -> (i32, i32) {
    %c0_i32 = arith.constant 0 : i32
    %c0_i32_0 = arith.constant 0 : i32
    %c0_i32_1 = arith.constant 0 : i32
    return %c0_i32, %c0_i32_0 : i32, i32
  }
  func.func @transform_10(%arg0: i32) -> (i32, i32) {
    %c0_i32 = arith.constant 0 : i32
    %c0_i32_0 = arith.constant 0 : i32
    %c0_i32_1 = arith.constant 0 : i32
    return %c0_i32, %c0_i32_0 : i32, i32
  }
  func.func @transform_11(%arg0: i32) -> (i32, i32) {
    %c0_i32 = arith.constant 0 : i32
    %c0_i32_0 = arith.constant 0 : i32
    %c0_i32_1 = arith.constant 0 : i32
    return %c0_i32, %c0_i32_0 : i32, i32
  }
  func.func @transform_12(%arg0: i32) -> (i32, i32) {
    %c0_i32 = arith.constant 0 : i32
    %c0_i32_0 = arith.constant 0 : i32
    %c0_i32_1 = arith.constant 0 : i32
    return %c0_i32, %c0_i32_0 : i32, i32
  }
  func.func @transform_13(%arg0: i32) -> (i32, i32) {
    %c0_i32 = arith.constant 0 : i32
    %c0_i32_0 = arith.constant 0 : i32
    %c0_i32_1 = arith.constant 0 : i32
    return %c0_i32, %c0_i32_0 : i32, i32
  }
  func.func @transform_14(%arg0: i32) -> (i32, i32) {
    %c0_i32 = arith.constant 0 : i32
    %c0_i32_0 = arith.constant 0 : i32
    %c0_i32_1 = arith.constant 0 : i32
    return %c0_i32, %c0_i32_0 : i32, i32
  }
  func.func @transform_15(%arg0: i32) -> (i32, i32) {
    %c0_i32 = arith.constant 0 : i32
    %c0_i32_0 = arith.constant 0 : i32
    %c0_i32_1 = arith.constant 0 : i32
    return %c0_i32, %c0_i32_0 : i32, i32
  }
  func.func @transform_16(%arg0: i32) -> (i32, i32) {
    %c0_i32 = arith.constant 0 : i32
    %c0_i32_0 = arith.constant 0 : i32
    %c0_i32_1 = arith.constant 0 : i32
    return %c0_i32, %c0_i32_0 : i32, i32
  }
  func.func @transform_17(%arg0: i32) -> (i32, i32) {
    %c0_i32 = arith.constant 0 : i32
    %c0_i32_0 = arith.constant 0 : i32
    %c0_i32_1 = arith.constant 0 : i32
    return %c0_i32, %c0_i32_0 : i32, i32
  }
  func.func @transform_18(%arg0: i32) -> (i32, i32) {
    %c0_i32 = arith.constant 0 : i32
    %c0_i32_0 = arith.constant 0 : i32
    %c0_i32_1 = arith.constant 0 : i32
    return %c0_i32, %c0_i32_0 : i32, i32
  }
  func.func @transform_19(%arg0: i32) -> (i32, i32) {
    %c0_i32 = arith.constant 0 : i32
    %c0_i32_0 = arith.constant 0 : i32
    return %arg0, %c0_i32 : i32, i32
  }
}

</mosaic_0001>

<llo_original>
// kernel: _rhs.1
$region0: #{_rhs.1}
  #allocation0 [shape = 'u32[]', space=smem, size = 0x4, offset = 0x4, fixed_abs, tag = 'smem constant byte address 0x4 - core index']
  #allocation1 [shape = 'u32[144,128]{1,0:T(1,128)}', space=vmem, size = 0x12000, scoped, tag = 'internal scratch']
  %s0 = inlined_call_operand.hbm [shape: f32[8,8], index: 0, kind: input, shape index: {}]
  %s1 = inlined_call_operand.vmem [shape: f32[8,48], index: 1, kind: input, shape index: {}]
  %s2 = inlined_call_operand.hbm [shape: f32[1,48], index: 2, kind: input, shape index: {}]
  %s3 = inlined_call_operand.vmem [shape: f32[32,32], index: 3, kind: input, shape index: {}]
  %s4 = inlined_call_operand.vmem [shape: f32[32,32], index: 4, kind: input, shape index: {}]
  %s5 = inlined_call_operand.hbm [shape: f32[1,32], index: 5, kind: input, shape index: {}]
  %s6 = inlined_call_operand.hbm [shape: f32[1,32], index: 6, kind: input, shape index: {}]
  %s7 = inlined_call_operand.vmem [shape: f32[32,32], index: 7, kind: input, shape index: {}]
  %s8 = inlined_call_operand.hbm [shape: f32[32,32], index: 8, kind: input, shape index: {}]
  %s9 = inlined_call_operand.hbm [shape: f32[1,32], index: 9, kind: input, shape index: {}]
  %s10 = inlined_call_operand.hbm [shape: f32[16,16], index: 10, kind: input, shape index: {}]
  %s11 = inlined_call_operand.hbm [shape: f32[1,16], index: 11, kind: input, shape index: {}]
  %s12 = inlined_call_operand.hbm [shape: f32[16,16], index: 12, kind: input, shape index: {}]
  %s13 = inlined_call_operand.hbm [shape: f32[1,16], index: 13, kind: input, shape index: {}]
  %s14 = inlined_call_operand.vmem [shape: f32[32,96], index: 14, kind: input, shape index: {}]
  %s15 = inlined_call_operand.vmem [shape: f32[16,64], index: 15, kind: input, shape index: {}]
  %s16 = inlined_call_operand.vmem [shape: f32[64,12], index: 16, kind: input, shape index: {}]
  %s17 = inlined_call_operand.hbm [shape: f32[4,32], index: 17, kind: input, shape index: {}]
  %s18 = inlined_call_operand.vmem [shape: f32[32,8], index: 18, kind: input, shape index: {}]
  %s19 = inlined_call_operand.hbm [shape: f32[8,8], index: 19, kind: output, shape index: {}]
  %s20 = sld [smem:[#allocation0]]
  $region130: #{_rhs.1} parent=0
    _
  %s22 = ssub.s32 1, %s20
  %s23 = scalar_select 0, %s22, %s20
  $region1: #{_rhs.1} parent=0
    #allocation2 [shape = 'u8[4096]{0}', space=vmem, size = 0x1000, scoped, tag = 'input window, operand 0, single buffered']
    #allocation3 [shape = 's32[1]{0}', space=sflag, size = 0x4, scoped, tag = 'scoped memory for _rhs.1']
    #allocation4 [shape = 's32[1]{0}', space=sflag, size = 0x4, scoped, tag = 'scoped memory for _rhs.1']
    #allocation5 [shape = 'u8[512]{0}', space=vmem, size = 0x400, scoped, tag = 'input window, operand 2, single buffered']
    #allocation6 [shape = 's32[1]{0}', space=sflag, size = 0x4, scoped, tag = 'scoped memory for _rhs.1']
    #allocation7 [shape = 'u8[512]{0}', space=vmem, size = 0x400, scoped, tag = 'input window, operand 5, single buffered']
    #allocation8 [shape = 'u8[512]{0}', space=vmem, size = 0x400, scoped, tag = 'input window, operand 6, single buffered']
    #allocation9 [shape = 's32[1]{0}', space=sflag, size = 0x4, scoped, tag = 'scoped memory for _rhs.1']
    #allocation10 [shape = 'u8[16384]{0}', space=vmem, size = 0x4000, scoped, tag = 'input window, operand 8, single buffered']
    #allocation11 [shape = 'u8[512]{0}', space=vmem, size = 0x400, scoped, tag = 'input window, operand 9, single buffered']
    #allocation12 [shape = 's32[1]{0}', space=sflag, size = 0x4, scoped, tag = 'scoped memory for _rhs.1']
    #allocation13 [shape = 'u8[8192]{0}', space=vmem, size = 0x2000, scoped, tag = 'input window, operand 10, single buffered']
    #allocation14 [shape = 'u8[512]{0}', space=vmem, size = 0x400, scoped, tag = 'input window, operand 11, single buffered']
    #allocation15 [shape = 's32[1]{0}', space=sflag, size = 0x4, scoped, tag = 'scoped memory for _rhs.1']
    #allocation16 [shape = 'u8[8192]{0}', space=vmem, size = 0x2000, scoped, tag = 'input window, operand 12, single buffered']
    #allocation17 [shape = 'u8[512]{0}', space=vmem, size = 0x400, scoped, tag = 'input window, operand 13, single buffered']
    #allocation18 [shape = 's32[1]{0}', space=sflag, size = 0x4, scoped, tag = 'scoped memory for _rhs.1']
    #allocation19 [shape = 'u8[2048]{0}', space=vmem, size = 0x800, scoped, tag = 'input window, operand 17, single buffered']
    #allocation20 [shape = 'u8[4096]{0}', space=vmem, size = 0x1000, scoped, tag = 'output window, operand 0, single buffered']
    %24 = vsyncpa [#allocation3], 0
    %25 = vsyncpa [#allocation6], 0
    %26 = vsyncpa [#allocation9], 0
    %27 = vsyncpa [#allocation12], 0
    %28 = vsyncpa [#allocation15], 0
    %29 = vsyncpa [#allocation18], 0
    %30 = vsyncpa [#allocation4], 0
    // Predicated region
    $region2: #{_rhs.1} parent=1 // pred_check
      _
    $region3: #{_rhs.1} parent=1 // pred_check_branch
      %32 = sbr.rel (0) target = $region5
    $region4: #{_rhs.1} parent=1 // pred_region
      %s34 = ssub.s32 128, 128
      %35 = vsyncadd [#allocation3], %s34
      %s37 = sshll.u32 [#allocation2], 4
      %s38 = int_to_ptr.vmem [resolvable:$true] %s37
      %40 = dma.hbm_to_vmem [thread:$0]  %s0, 128, %s38, [#allocation3]
    $region5: #{_rhs.1} parent=1 // pred_fallthru
      _
    // Predicated region
    $region6: #{_rhs.1} parent=1 // pred_check
      _
    $region7: #{_rhs.1} parent=1 // pred_check_branch
      %42 = sbr.rel (0) target = $region9
    $region8: #{_rhs.1} parent=1 // pred_region
      _
    $region9: #{_rhs.1} parent=1 // pred_fallthru
      _
    // Predicated region
    $region10: #{_rhs.1} parent=1 // pred_check
      _
    $region11: #{_rhs.1} parent=1 // pred_check_branch
      %44 = sbr.rel (0) target = $region13
    $region12: #{_rhs.1} parent=1 // pred_region
      %s46 = ssub.s32 16, 16
      %47 = vsyncadd [#allocation6], %s46
      %s49 = sshll.u32 [#allocation5], 4
      %s50 = int_to_ptr.vmem [resolvable:$true] %s49
      %52 = dma.hbm_to_vmem [thread:$0]  %s2, 16, %s50, [#allocation6]
    $region13: #{_rhs.1} parent=1 // pred_fallthru
      _
    // Predicated region
    $region14: #{_rhs.1} parent=1 // pred_check
      _
    $region15: #{_rhs.1} parent=1 // pred_check_branch
      %54 = sbr.rel (0) target = $region17
    $region16: #{_rhs.1} parent=1 // pred_region
      _
    $region17: #{_rhs.1} parent=1 // pred_fallthru
      _
    // Predicated region
    $region18: #{_rhs.1} parent=1 // pred_check
      _
    $region19: #{_rhs.1} parent=1 // pred_check_branch
      %56 = sbr.rel (0) target = $region21
    $region20: #{_rhs.1} parent=1 // pred_region
      _
    $region21: #{_rhs.1} parent=1 // pred_fallthru
      _
    // Predicated region
    $region22: #{_rhs.1} parent=1 // pred_check
      _
    $region23: #{_rhs.1} parent=1 // pred_check_branch
      %58 = sbr.rel (0) target = $region25
    $region24: #{_rhs.1} parent=1 // pred_region
      %s60 = ssub.s32 16, 16
      %61 = vsyncadd [#allocation6], %s60
      %s63 = sshll.u32 [#allocation7], 4
      %s64 = int_to_ptr.vmem [resolvable:$true] %s63
      %66 = dma.hbm_to_vmem [thread:$0]  %s5, 16, %s64, [#allocation6]
    $region25: #{_rhs.1} parent=1 // pred_fallthru
      _
    // Predicated region
    $region26: #{_rhs.1} parent=1 // pred_check
      _
    $region27: #{_rhs.1} parent=1 // pred_check_branch
      %68 = sbr.rel (0) target = $region29
    $region28: #{_rhs.1} parent=1 // pred_region
      %s70 = ssub.s32 16, 16
      %71 = vsyncadd [#allocation9], %s70
      %s73 = sshll.u32 [#allocation8], 4
      %s74 = int_to_ptr.vmem [resolvable:$true] %s73
      %76 = dma.hbm_to_vmem [thread:$0]  %s6, 16, %s74, [#allocation9]
    $region29: #{_rhs.1} parent=1 // pred_fallthru
      _
    // Predicated region
    $region30: #{_rhs.1} parent=1 // pred_check
      _
    $region31: #{_rhs.1} parent=1 // pred_check_branch
      %78 = sbr.rel (0) target = $region33
    $region32: #{_rhs.1} parent=1 // pred_region
      _
    $region33: #{_rhs.1} parent=1 // pred_fallthru
      _
    // Predicated region
    $region34: #{_rhs.1} parent=1 // pred_check
      _
    $region35: #{_rhs.1} parent=1 // pred_check_branch
      %80 = sbr.rel (0) target = $region37
    $region36: #{_rhs.1} parent=1 // pred_region
      %s82 = ssub.s32 512, 512
      %83 = vsyncadd [#allocation9], %s82
      %s84 = sshll.u32 [#allocation10], 4
      %s85 = int_to_ptr.vmem [resolvable:$true] %s84
      %90 = dma.hbm_to_vmem [thread:$0]  %s8, 512, %s85, [#allocation9], 128, 128, 8
    $region37: #{_rhs.1} parent=1 // pred_fallthru
      _
    // Predicated region
    $region38: #{_rhs.1} parent=1 // pred_check
      _
    $region39: #{_rhs.1} parent=1 // pred_check_branch
      %92 = sbr.rel (0) target = $region41
    $region40: #{_rhs.1} parent=1 // pred_region
      %s94 = ssub.s32 16, 16
      %95 = vsyncadd [#allocation12], %s94
      %s97 = sshll.u32 [#allocation11], 4
      %s98 = int_to_ptr.vmem [resolvable:$true] %s97
      %100 = dma.hbm_to_vmem [thread:$0]  %s9, 16, %s98, [#allocation12]
    $region41: #{_rhs.1} parent=1 // pred_fallthru
      _
    // Predicated region
    $region42: #{_rhs.1} parent=1 // pred_check
      _
    $region43: #{_rhs.1} parent=1 // pred_check_branch
      %102 = sbr.rel (0) target = $region45
    $region44: #{_rhs.1} parent=1 // pred_region
      %s104 = ssub.s32 256, 256
      %105 = vsyncadd [#allocation12], %s104
      %s106 = sshll.u32 [#allocation13], 4
      %s107 = int_to_ptr.vmem [resolvable:$true] %s106
      %112 = dma.hbm_to_vmem [thread:$0]  %s10, 256, %s107, [#allocation12], 128, 128, 8
    $region45: #{_rhs.1} parent=1 // pred_fallthru
      _
    // Predicated region
    $region46: #{_rhs.1} parent=1 // pred_check
      _
    $region47: #{_rhs.1} parent=1 // pred_check_branch
      %114 = sbr.rel (0) target = $region49
    $region48: #{_rhs.1} parent=1 // pred_region
      %s116 = ssub.s32 16, 16
      %117 = vsyncadd [#allocation15], %s116
      %s119 = sshll.u32 [#allocation14], 4
      %s120 = int_to_ptr.vmem [resolvable:$true] %s119
      %122 = dma.hbm_to_vmem [thread:$0]  %s11, 16, %s120, [#allocation15]
    $region49: #{_rhs.1} parent=1 // pred_fallthru
      _
    // Predicated region
    $region50: #{_rhs.1} parent=1 // pred_check
      _
    $region51: #{_rhs.1} parent=1 // pred_check_branch
      %124 = sbr.rel (0) target = $region53
    $region52: #{_rhs.1} parent=1 // pred_region
      %s126 = ssub.s32 256, 256
      %127 = vsyncadd [#allocation15], %s126
      %s128 = sshll.u32 [#allocation16], 4
      %s129 = int_to_ptr.vmem [resolvable:$true] %s128
      %134 = dma.hbm_to_vmem [thread:$0]  %s12, 256, %s129, [#allocation15], 128, 128, 8
    $region53: #{_rhs.1} parent=1 // pred_fallthru
      _
    // Predicated region
    $region54: #{_rhs.1} parent=1 // pred_check
      _
    $region55: #{_rhs.1} parent=1 // pred_check_branch
      %136 = sbr.rel (0) target = $region57
    $region56: #{_rhs.1} parent=1 // pred_region
      %s138 = ssub.s32 16, 16
      %139 = vsyncadd [#allocation18], %s138
      %s141 = sshll.u32 [#allocation17], 4
      %s142 = int_to_ptr.vmem [resolvable:$true] %s141
      %144 = dma.hbm_to_vmem [thread:$0]  %s13, 16, %s142, [#allocation18]
    $region57: #{_rhs.1} parent=1 // pred_fallthru
      _
    // Predicated region
    $region58: #{_rhs.1} parent=1 // pred_check
      _
    $region59: #{_rhs.1} parent=1 // pred_check_branch
      %146 = sbr.rel (0) target = $region61
    $region60: #{_rhs.1} parent=1 // pred_region
      _
    $region61: #{_rhs.1} parent=1 // pred_fallthru
      _
    // Predicated region
    $region62: #{_rhs.1} parent=1 // pred_check
      _
    $region63: #{_rhs.1} parent=1 // pred_check_branch
      %148 = sbr.rel (0) target = $region65
    $region64: #{_rhs.1} parent=1 // pred_region
      _
    $region65: #{_rhs.1} parent=1 // pred_fallthru
      _
    // Predicated region
    $region66: #{_rhs.1} parent=1 // pred_check
      _
    $region67: #{_rhs.1} parent=1 // pred_check_branch
      %150 = sbr.rel (0) target = $region69
    $region68: #{_rhs.1} parent=1 // pred_region
      _
    $region69: #{_rhs.1} parent=1 // pred_fallthru
      _
    // Predicated region
    $region70: #{_rhs.1} parent=1 // pred_check
      _
    $region71: #{_rhs.1} parent=1 // pred_check_branch
      %152 = sbr.rel (0) target = $region73
    $region72: #{_rhs.1} parent=1 // pred_region
      %s154 = ssub.s32 64, 64
      %155 = vsyncadd [#allocation18], %s154
      %s157 = sshll.u32 [#allocation19], 4
      %s158 = int_to_ptr.vmem [resolvable:$true] %s157
      %160 = dma.hbm_to_vmem [thread:$0]  %s17, 64, %s158, [#allocation18]
    $region73: #{_rhs.1} parent=1 // pred_fallthru
      _
    // Predicated region
    $region74: #{_rhs.1} parent=1 // pred_check
      _
    $region75: #{_rhs.1} parent=1 // pred_check_branch
      %162 = sbr.rel (0) target = $region77
    $region76: #{_rhs.1} parent=1 // pred_region
      _
    $region77: #{_rhs.1} parent=1 // pred_fallthru
      _
    // Predicated region
    $region78: #{_rhs.1} parent=1 // pred_check
      _
    $region79: #{_rhs.1} parent=1 // pred_check_branch
      %164 = sbr.rel (0) target = $region81
    $region80: #{_rhs.1} parent=1 // pred_region
      %165 = dma.done [#allocation3], 128
    $region81: #{_rhs.1} parent=1 // pred_fallthru
      _
    // Predicated region
    $region82: #{_rhs.1} parent=1 // pred_check
      _
    $region83: #{_rhs.1} parent=1 // pred_check_branch
      %167 = sbr.rel (0) target = $region85
    $region84: #{_rhs.1} parent=1 // pred_region
      %168 = dma.done [#allocation6], 16
    $region85: #{_rhs.1} parent=1 // pred_fallthru
      _
    // Predicated region
    $region86: #{_rhs.1} parent=1 // pred_check
      _
    $region87: #{_rhs.1} parent=1 // pred_check_branch
      %170 = sbr.rel (0) target = $region89
    $region88: #{_rhs.1} parent=1 // pred_region
      %171 = dma.done [#allocation6], 16
    $region89: #{_rhs.1} parent=1 // pred_fallthru
      _
    // Predicated region
    $region90: #{_rhs.1} parent=1 // pred_check
      _
    $region91: #{_rhs.1} parent=1 // pred_check_branch
      %173 = sbr.rel (0) target = $region93
    $region92: #{_rhs.1} parent=1 // pred_region
      %174 = dma.done [#allocation9], 16
    $region93: #{_rhs.1} parent=1 // pred_fallthru
      _
    // Predicated region
    $region94: #{_rhs.1} parent=1 // pred_check
      _
    $region95: #{_rhs.1} parent=1 // pred_check_branch
      %176 = sbr.rel (0) target = $region97
    $region96: #{_rhs.1} parent=1 // pred_region
      %177 = dma.done [#allocation9], 512
    $region97: #{_rhs.1} parent=1 // pred_fallthru
      _
    // Predicated region
    $region98: #{_rhs.1} parent=1 // pred_check
      _
    $region99: #{_rhs.1} parent=1 // pred_check_branch
      %179 = sbr.rel (0) target = $region101
    $region100: #{_rhs.1} parent=1 // pred_region
      %180 = dma.done [#allocation12], 16
    $region101: #{_rhs.1} parent=1 // pred_fallthru
      _
    // Predicated region
    $region102: #{_rhs.1} parent=1 // pred_check
      _
    $region103: #{_rhs.1} parent=1 // pred_check_branch
      %182 = sbr.rel (0) target = $region105
    $region104: #{_rhs.1} parent=1 // pred_region
      %183 = dma.done [#allocation12], 256
    $region105: #{_rhs.1} parent=1 // pred_fallthru
      _
    // Predicated region
    $region106: #{_rhs.1} parent=1 // pred_check
      _
    $region107: #{_rhs.1} parent=1 // pred_check_branch
      %185 = sbr.rel (0) target = $region109
    $region108: #{_rhs.1} parent=1 // pred_region
      %186 = dma.done [#allocation15], 16
    $region109: #{_rhs.1} parent=1 // pred_fallthru
      _
    // Predicated region
    $region110: #{_rhs.1} parent=1 // pred_check
      _
    $region111: #{_rhs.1} parent=1 // pred_check_branch
      %188 = sbr.rel (0) target = $region113
    $region112: #{_rhs.1} parent=1 // pred_region
      %189 = dma.done [#allocation15], 256
    $region113: #{_rhs.1} parent=1 // pred_fallthru
      _
    // Predicated region
    $region114: #{_rhs.1} parent=1 // pred_check
      _
    $region115: #{_rhs.1} parent=1 // pred_check_branch
      %191 = sbr.rel (0) target = $region117
    $region116: #{_rhs.1} parent=1 // pred_region
      %192 = dma.done [#allocation18], 16
    $region117: #{_rhs.1} parent=1 // pred_fallthru
      _
    // Predicated region
    $region118: #{_rhs.1} parent=1 // pred_check
      _
    $region119: #{_rhs.1} parent=1 // pred_check_branch
      %194 = sbr.rel (0) target = $region121
    $region120: #{_rhs.1} parent=1 // pred_region
      %195 = dma.done [#allocation18], 64
    $region121: #{_rhs.1} parent=1 // pred_fallthru
      _
    %v196 = vld [vmem:[#allocation2] sm:$0xff]
    %v197 = vld [vmem:[%s1] sm:$0xff]
    %v198 = vld [vmem:[#allocation5] sm:$0x1]
    %v199 = vld [vmem:[%s3] sm:$0xff]
    %v200 = vld [vmem:[%s3 + $0x8] sm:$0xff]
    %v201 = vld [vmem:[%s3 + $0x10] sm:$0xff]
    %v202 = vld [vmem:[%s3 + $0x18] sm:$0xff]
    %v203 = vld [vmem:[%s4] sm:$0xff]
    %v204 = vld [vmem:[%s4 + $0x8] sm:$0xff]
    %v205 = vld [vmem:[%s4 + $0x10] sm:$0xff]
    %v206 = vld [vmem:[%s4 + $0x18] sm:$0xff]
    %v207 = vld [vmem:[#allocation7] sm:$0x1]
    %v208 = vld [vmem:[#allocation8] sm:$0x1]
    %v209 = vld [vmem:[%s7] sm:$0xff]
    %v210 = vld [vmem:[%s7 + $0x8] sm:$0xff]
    %v211 = vld [vmem:[%s7 + $0x10] sm:$0xff]
    %v212 = vld [vmem:[%s7 + $0x18] sm:$0xff]
    %v213 = vld [vmem:[#allocation10] sm:$0xff]
    %v214 = vld [vmem:[#allocation10 + $0x8] sm:$0xff]
    %v215 = vld [vmem:[#allocation10 + $0x10] sm:$0xff]
    %v216 = vld [vmem:[#allocation10 + $0x18] sm:$0xff]
    %v217 = vld [vmem:[#allocation11] sm:$0x1]
    %v218 = vld [vmem:[#allocation13] sm:$0xff]
    %v219 = vld [vmem:[#allocation13 + $0x8] sm:$0xff]
    %v220 = vld [vmem:[#allocation14] sm:$0x1]
    %v221 = vld [vmem:[#allocation16] sm:$0xff]
    %v222 = vld [vmem:[#allocation16 + $0x8] sm:$0xff]
    %v223 = vld [vmem:[#allocation17] sm:$0x1]
    %v224 = vld [vmem:[%s14] sm:$0xff]
    %v225 = vld [vmem:[%s14 + $0x8] sm:$0xff]
    %v226 = vld [vmem:[%s14 + $0x10] sm:$0xff]
    %v227 = vld [vmem:[%s14 + $0x18] sm:$0xff]
    %v228 = vld [vmem:[%s15] sm:$0xff]
    %v229 = vld [vmem:[%s15 + $0x8] sm:$0xff]
    %v230 = vld [vmem:[%s16] sm:$0xff]
    %v231 = vld [vmem:[%s16 + $0x8] sm:$0xff]
    %v232 = vld [vmem:[%s16 + $0x10] sm:$0xff]
    %v233 = vld [vmem:[%s16 + $0x18] sm:$0xff]
    %v234 = vld [vmem:[%s16 + $0x20] sm:$0xff]
    %v235 = vld [vmem:[%s16 + $0x28] sm:$0xff]
    %v236 = vld [vmem:[%s16 + $0x30] sm:$0xff]
    %v237 = vld [vmem:[%s16 + $0x38] sm:$0xff]
    %v238 = vld [vmem:[#allocation19] sm:$0xf]
    %v239 = vld [vmem:[%s18] sm:$0xff]
    %v240 = vld [vmem:[%s18 + $0x8] sm:$0xff]
    %v241 = vld [vmem:[%s18 + $0x10] sm:$0xff]
    %v242 = vld [vmem:[%s18 + $0x18] sm:$0xff]
    %v244 = vlaneseq
    %v245 = vshrl.u32 %v244, 7
    %v246 = vsub.s32 0, %v245
    %v247 = vrot.slane %v198, %v246
    %vm249 = vcmask 64512
    %v251 = vsel %vm249, %v196, 0
    %253 = vmatprep.subr.mxu0 0.0
    %254 = vmatpush1.msra.mxu0 %v197
    %255 = vmatprep.subr.mxu0 0.0
    %256 = vmatpush1.msra.mxu0 0.0
    %257 = vmatprep.subr.mxu0 0.0
    %258 = vmatpush1.msra.mxu0 0.0
    %259 = vmatprep.subr.mxu0 0.0
    %260 = vmatpush1.msra.mxu0 0.0
    %261 = vmatprep.subr.mxu0 0.0
    %262 = vmatpush1.msra.mxu0 0.0
    %263 = vmatprep.subr.mxu0 0.0
    %264 = vmatpush1.msra.mxu0 0.0
    %265 = vmatprep.subr.mxu0 0.0
    %266 = vmatpush1.msra.mxu0 0.0
    %267 = vmatprep.subr.mxu0 0.0
    %268 = vmatpush1.msra.mxu0 0.0
    %269 = vmatprep.subr.mxu0 0.0
    %270 = vmatpush1.msra.mxu0 0.0
    %271 = vmatprep.subr.mxu0 0.0
    %272 = vmatpush1.msra.mxu0 0.0
    %273 = vmatprep.subr.mxu0 0.0
    %274 = vmatpush1.msra.mxu0 0.0
    %275 = vmatprep.subr.mxu0 0.0
    %276 = vmatpush1.msra.mxu0 0.0
    %277 = vmatprep.subr.mxu0 0.0
    %278 = vmatpush1.msra.mxu0 0.0
    %279 = vmatprep.subr.mxu0 0.0
    %280 = vmatpush1.msra.mxu0 0.0
    %281 = vmatprep.subr.mxu0 0.0
    %282 = vmatpush1.msra.mxu0 0.0
    %283 = vmatprep.subr.mxu0 0.0
    %284 = vmatpush1.msra.mxu0 0.0
    %285 = vmatprep.subr.mxu0 0.0
    %286 = vmatpush1.msra.mxu0 0.0
    %287 = vmatprep.subr.mxu0 0.0
    %288 = vmatpush1.msra.mxu0 0.0
    %289 = vmatprep.subr.mxu0 0.0
    %290 = vmatpush1.msra.mxu0 0.0
    %291 = vmatprep.subr.mxu0 0.0
    %292 = vmatpush1.msra.mxu0 0.0
    %293 = vmatprep.subr.mxu0 0.0
    %294 = vmatpush1.msra.mxu0 0.0
    %295 = vmatprep.subr.mxu0 0.0
    %296 = vmatpush1.msra.mxu0 0.0
    %297 = vmatprep.subr.mxu0 0.0
    %298 = vmatpush1.msra.mxu0 0.0
    %299 = vmatprep.subr.mxu0 0.0
    %300 = vmatpush1.msra.mxu0 0.0
    %301 = vmatprep.subr.mxu0 0.0
    %302 = vmatpush1.msra.mxu0 0.0
    %303 = vmatprep.subr.mxu0 0.0
    %304 = vmatpush1.msra.mxu0 0.0
    %305 = vmatprep.subr.mxu0 0.0
    %306 = vmatpush1.msra.mxu0 0.0
    %307 = vmatprep.subr.mxu0 0.0
    %308 = vmatpush1.msra.mxu0 0.0
    %309 = vmatprep.subr.mxu0 0.0
    %310 = vmatpush1.msra.mxu0 0.0
    %311 = vmatprep.subr.mxu0 0.0
    %312 = vmatpush1.msra.mxu0 0.0
    %313 = vmatprep.subr.mxu0 0.0
    %314 = vmatpush1.msra.mxu0 0.0
    %315 = vmatprep.subr.mxu0 0.0
    %316 = vmatpush1.msra.mxu0 0.0
    %317 = vmatprep.mubr.f32.mxu0 0.0
    %318 = vmatmul.mubr.f32.gmra.mrb[0].mxu0 %v251
    %v319 = vpop.f32.mrb[0].mxu0
    %v320 = vadd.f32 %v247, %v319
    %v321 = vpop.f32.mrb[0].mxu0
    %322 = vdwg.mxu0
    %v323 = vtanh.pop %v320
    %v325 = vlaneseq
    %v326 = vshrl.u32 %v325, 7
    %v327 = vsub.s32 0, %v326
    %v328 = vrot.slane %v207, %v327
    %vm330 = vcmask 261120
    %v332 = vsel %vm330, %v323, 0
    %334 = vmatprep.subr.mxu0 0.0
    %335 = vmatpush1.msra.mxu0 %v199
    %336 = vmatprep.subr.mxu0 0.0
    %337 = vmatpush1.msra.mxu0 %v200
    %338 = vmatprep.subr.mxu0 0.0
    %339 = vmatpush1.msra.mxu0 %v201
    %340 = vmatprep.subr.mxu0 0.0
    %341 = vmatpush1.msra.mxu0 %v202
    %342 = vmatprep.subr.mxu0 0.0
    %343 = vmatpush1.msra.mxu0 0.0
    %344 = vmatprep.subr.mxu0 0.0
    %345 = vmatpush1.msra.mxu0 0.0
    %346 = vmatprep.subr.mxu0 0.0
    %347 = vmatpush1.msra.mxu0 0.0
    %348 = vmatprep.subr.mxu0 0.0
    %349 = vmatpush1.msra.mxu0 0.0
    %350 = vmatprep.subr.mxu0 0.0
    %351 = vmatpush1.msra.mxu0 0.0
    %352 = vmatprep.subr.mxu0 0.0
    %353 = vmatpush1.msra.mxu0 0.0
    %354 = vmatprep.subr.mxu0 0.0
    %355 = vmatpush1.msra.mxu0 0.0
    %356 = vmatprep.subr.mxu0 0.0
    %357 = vmatpush1.msra.mxu0 0.0
    %358 = vmatprep.subr.mxu0 0.0
    %359 = vmatpush1.msra.mxu0 0.0
    %360 = vmatprep.subr.mxu0 0.0
    %361 = vmatpush1.msra.mxu0 0.0
    %362 = vmatprep.subr.mxu0 0.0
    %363 = vmatpush1.msra.mxu0 0.0
    %364 = vmatprep.subr.mxu0 0.0
    %365 = vmatpush1.msra.mxu0 0.0
    %366 = vmatprep.subr.mxu0 0.0
    %367 = vmatpush1.msra.mxu0 0.0
    %368 = vmatprep.subr.mxu0 0.0
    %369 = vmatpush1.msra.mxu0 0.0
    %370 = vmatprep.subr.mxu0 0.0
    %371 = vmatpush1.msra.mxu0 0.0
    %372 = vmatprep.subr.mxu0 0.0
    %373 = vmatpush1.msra.mxu0 0.0
    %374 = vmatprep.subr.mxu0 0.0
    %375 = vmatpush1.msra.mxu0 0.0
    %376 = vmatprep.subr.mxu0 0.0
    %377 = vmatpush1.msra.mxu0 0.0
    %378 = vmatprep.subr.mxu0 0.0
    %379 = vmatpush1.msra.mxu0 0.0
    %380 = vmatprep.subr.mxu0 0.0
    %381 = vmatpush1.msra.mxu0 0.0
    %382 = vmatprep.subr.mxu0 0.0
    %383 = vmatpush1.msra.mxu0 0.0
    %384 = vmatprep.subr.mxu0 0.0
    %385 = vmatpush1.msra.mxu0 0.0
    %386 = vmatprep.subr.mxu0 0.0
    %387 = vmatpush1.msra.mxu0 0.0
    %388 = vmatprep.subr.mxu0 0.0
    %389 = vmatpush1.msra.mxu0 0.0
    %390 = vmatprep.subr.mxu0 0.0
    %391 = vmatpush1.msra.mxu0 0.0
    %392 = vmatprep.subr.mxu0 0.0
    %393 = vmatpush1.msra.mxu0 0.0
    %394 = vmatprep.subr.mxu0 0.0
    %395 = vmatpush1.msra.mxu0 0.0
    %396 = vmatprep.subr.mxu0 0.0
    %397 = vmatpush1.msra.mxu0 0.0
    %398 = vmatprep.mubr.f32.mxu0 0.0
    %399 = vmatmul.mubr.f32.gmra.mrb[0].mxu0 %v332
    %v400 = vpop.f32.mrb[0].mxu0
    %v401 = vadd.f32 %v328, %v400
    %v402 = vpop.f32.mrb[0].mxu0
    %403 = vdwg.mxu0
    %v404 = vtanh.pop %v401
    %v406 = vlaneseq
    %v407 = vshrl.u32 %v406, 7
    %v408 = vsub.s32 0, %v407
    %v409 = vrot.slane %v208, %v408
    %v412 = vsel %vm330, %v404, 0
    %414 = vmatprep.subr.mxu0 0.0
    %415 = vmatpush1.msra.mxu0 %v203
    %416 = vmatprep.subr.mxu0 0.0
    %417 = vmatpush1.msra.mxu0 %v204
    %418 = vmatprep.subr.mxu0 0.0
    %419 = vmatpush1.msra.mxu0 %v205
    %420 = vmatprep.subr.mxu0 0.0
    %421 = vmatpush1.msra.mxu0 %v206
    %422 = vmatprep.subr.mxu0 0.0
    %423 = vmatpush1.msra.mxu0 0.0
    %424 = vmatprep.subr.mxu0 0.0
    %425 = vmatpush1.msra.mxu0 0.0
    %426 = vmatprep.subr.mxu0 0.0
    %427 = vmatpush1.msra.mxu0 0.0
    %428 = vmatprep.subr.mxu0 0.0
    %429 = vmatpush1.msra.mxu0 0.0
    %430 = vmatprep.subr.mxu0 0.0
    %431 = vmatpush1.msra.mxu0 0.0
    %432 = vmatprep.subr.mxu0 0.0
    %433 = vmatpush1.msra.mxu0 0.0
    %434 = vmatprep.subr.mxu0 0.0
    %435 = vmatpush1.msra.mxu0 0.0
    %436 = vmatprep.subr.mxu0 0.0
    %437 = vmatpush1.msra.mxu0 0.0
    %438 = vmatprep.subr.mxu0 0.0
    %439 = vmatpush1.msra.mxu0 0.0
    %440 = vmatprep.subr.mxu0 0.0
    %441 = vmatpush1.msra.mxu0 0.0
    %442 = vmatprep.subr.mxu0 0.0
    %443 = vmatpush1.msra.mxu0 0.0
    %444 = vmatprep.subr.mxu0 0.0
    %445 = vmatpush1.msra.mxu0 0.0
    %446 = vmatprep.subr.mxu0 0.0
    %447 = vmatpush1.msra.mxu0 0.0
    %448 = vmatprep.subr.mxu0 0.0
    %449 = vmatpush1.msra.mxu0 0.0
    %450 = vmatprep.subr.mxu0 0.0
    %451 = vmatpush1.msra.mxu0 0.0
    %452 = vmatprep.subr.mxu0 0.0
    %453 = vmatpush1.msra.mxu0 0.0
    %454 = vmatprep.subr.mxu0 0.0
    %455 = vmatpush1.msra.mxu0 0.0
    %456 = vmatprep.subr.mxu0 0.0
    %457 = vmatpush1.msra.mxu0 0.0
    %458 = vmatprep.subr.mxu0 0.0
    %459 = vmatpush1.msra.mxu0 0.0
    %460 = vmatprep.subr.mxu0 0.0
    %461 = vmatpush1.msra.mxu0 0.0
    %462 = vmatprep.subr.mxu0 0.0
    %463 = vmatpush1.msra.mxu0 0.0
    %464 = vmatprep.subr.mxu0 0.0
    %465 = vmatpush1.msra.mxu0 0.0
    %466 = vmatprep.subr.mxu0 0.0
    %467 = vmatpush1.msra.mxu0 0.0
    %468 = vmatprep.subr.mxu0 0.0
    %469 = vmatpush1.msra.mxu0 0.0
    %470 = vmatprep.subr.mxu0 0.0
    %471 = vmatpush1.msra.mxu0 0.0
    %472 = vmatprep.subr.mxu0 0.0
    %473 = vmatpush1.msra.mxu0 0.0
    %474 = vmatprep.subr.mxu0 0.0
    %475 = vmatpush1.msra.mxu0 0.0
    %476 = vmatprep.subr.mxu0 0.0
    %477 = vmatpush1.msra.mxu0 0.0
    %478 = vmatprep.mubr.f32.mxu0 0.0
    %479 = vmatmul.mubr.f32.gmra.mrb[0].mxu0 %v412
    %v480 = vpop.f32.mrb[0].mxu0
    %v481 = vadd.f32 %v409, %v480
    %v482 = vpop.f32.mrb[0].mxu0
    %483 = vdwg.mxu0
    %v484 = vtanh.pop %v481
    %v486 = vlaneseq
    %v487 = vshrl.u32 %v486, 7
    %v488 = vsub.s32 0, %v487
    %v489 = vrot.slane %v220, %v488
    %491 = vrot.lane.b32.xlu0 %v323, 96
    %v492 = vpop.permute.xlu0 %491
    %vm493 = vcmask 130048
    %v494 = vsel %vm493, %v492, 0
    %496 = vmatprep.subr.mxu0 0.0
    %497 = vmatpush1.msra.mxu0 %v218
    %498 = vmatprep.subr.mxu0 0.0
    %499 = vmatpush1.msra.mxu0 %v219
    %500 = vmatprep.subr.mxu0 0.0
    %501 = vmatpush1.msra.mxu0 0.0
    %502 = vmatprep.subr.mxu0 0.0
    %503 = vmatpush1.msra.mxu0 0.0
    %504 = vmatprep.subr.mxu0 0.0
    %505 = vmatpush1.msra.mxu0 0.0
    %506 = vmatprep.subr.mxu0 0.0
    %507 = vmatpush1.msra.mxu0 0.0
    %508 = vmatprep.subr.mxu0 0.0
    %509 = vmatpush1.msra.mxu0 0.0
    %510 = vmatprep.subr.mxu0 0.0
    %511 = vmatpush1.msra.mxu0 0.0
    %512 = vmatprep.subr.mxu0 0.0
    %513 = vmatpush1.msra.mxu0 0.0
    %514 = vmatprep.subr.mxu0 0.0
    %515 = vmatpush1.msra.mxu0 0.0
    %516 = vmatprep.subr.mxu0 0.0
    %517 = vmatpush1.msra.mxu0 0.0
    %518 = vmatprep.subr.mxu0 0.0
    %519 = vmatpush1.msra.mxu0 0.0
    %520 = vmatprep.subr.mxu0 0.0
    %521 = vmatpush1.msra.mxu0 0.0
    %522 = vmatprep.subr.mxu0 0.0
    %523 = vmatpush1.msra.mxu0 0.0
    %524 = vmatprep.subr.mxu0 0.0
    %525 = vmatpush1.msra.mxu0 0.0
    %526 = vmatprep.subr.mxu0 0.0
    %527 = vmatpush1.msra.mxu0 0.0
    %528 = vmatprep.subr.mxu0 0.0
    %529 = vmatpush1.msra.mxu0 0.0
    %530 = vmatprep.subr.mxu0 0.0
    %531 = vmatpush1.msra.mxu0 0.0
    %532 = vmatprep.subr.mxu0 0.0
    %533 = vmatpush1.msra.mxu0 0.0
    %534 = vmatprep.subr.mxu0 0.0
    %535 = vmatpush1.msra.mxu0 0.0
    %536 = vmatprep.subr.mxu0 0.0
    %537 = vmatpush1.msra.mxu0 0.0
    %538 = vmatprep.subr.mxu0 0.0
    %539 = vmatpush1.msra.mxu0 0.0
    %540 = vmatprep.subr.mxu0 0.0
    %541 = vmatpush1.msra.mxu0 0.0
    %542 = vmatprep.subr.mxu0 0.0
    %543 = vmatpush1.msra.mxu0 0.0
    %544 = vmatprep.subr.mxu0 0.0
    %545 = vmatpush1.msra.mxu0 0.0
    %546 = vmatprep.subr.mxu0 0.0
    %547 = vmatpush1.msra.mxu0 0.0
    %548 = vmatprep.subr.mxu0 0.0
    %549 = vmatpush1.msra.mxu0 0.0
    %550 = vmatprep.subr.mxu0 0.0
    %551 = vmatpush1.msra.mxu0 0.0
    %552 = vmatprep.subr.mxu0 0.0
    %553 = vmatpush1.msra.mxu0 0.0
    %554 = vmatprep.subr.mxu0 0.0
    %555 = vmatpush1.msra.mxu0 0.0
    %556 = vmatprep.subr.mxu0 0.0
    %557 = vmatpush1.msra.mxu0 0.0
    %558 = vmatprep.subr.mxu0 0.0
    %559 = vmatpush1.msra.mxu0 0.0
    %560 = vmatprep.mubr.f32.mxu0 0.0
    %561 = vmatmul.mubr.f32.gmra.mrb[0].mxu0 %v494
    %v562 = vpop.f32.mrb[0].mxu0
    %v563 = vadd.f32 %v489, %v562
    %v564 = vpop.f32.mrb[0].mxu0
    %565 = vdwg.mxu0
    %v566 = vtanh.pop %v563
    %v568 = vlaneseq
    %v569 = vshrl.u32 %v568, 7
    %v570 = vsub.s32 0, %v569
    %v571 = vrot.slane %v217, %v570
    %v573 = vmul.f32 %v484, %v484
    %v574 = vsub.f32 1.0, %v573
    %v575 = vmul.f32 %v571, %v574
    %v577 = vsel %vm330, %v575, 0
    %579 = vmatprep.subr.mxu0 0.0
    %580 = vmatpush1.msra.mxu0 %v213
    %581 = vmatprep.subr.mxu0 0.0
    %582 = vmatpush1.msra.mxu0 %v214
    %583 = vmatprep.subr.mxu0 0.0
    %584 = vmatpush1.msra.mxu0 %v215
    %585 = vmatprep.subr.mxu0 0.0
    %586 = vmatpush1.msra.mxu0 %v216
    %587 = vmatprep.subr.mxu0 0.0
    %588 = vmatpush1.msra.mxu0 0.0
    %589 = vmatprep.subr.mxu0 0.0
    %590 = vmatpush1.msra.mxu0 0.0
    %591 = vmatprep.subr.mxu0 0.0
    %592 = vmatpush1.msra.mxu0 0.0
    %593 = vmatprep.subr.mxu0 0.0
    %594 = vmatpush1.msra.mxu0 0.0
    %595 = vmatprep.subr.mxu0 0.0
    %596 = vmatpush1.msra.mxu0 0.0
    %597 = vmatprep.subr.mxu0 0.0
    %598 = vmatpush1.msra.mxu0 0.0
    %599 = vmatprep.subr.mxu0 0.0
    %600 = vmatpush1.msra.mxu0 0.0
    %601 = vmatprep.subr.mxu0 0.0
    %602 = vmatpush1.msra.mxu0 0.0
    %603 = vmatprep.subr.mxu0 0.0
    %604 = vmatpush1.msra.mxu0 0.0
    %605 = vmatprep.subr.mxu0 0.0
    %606 = vmatpush1.msra.mxu0 0.0
    %607 = vmatprep.subr.mxu0 0.0
    %608 = vmatpush1.msra.mxu0 0.0
    %609 = vmatprep.subr.mxu0 0.0
    %610 = vmatpush1.msra.mxu0 0.0
    %611 = vmatprep.subr.mxu0 0.0
    %612 = vmatpush1.msra.mxu0 0.0
    %613 = vmatprep.subr.mxu0 0.0
    %614 = vmatpush1.msra.mxu0 0.0
    %615 = vmatprep.subr.mxu0 0.0
    %616 = vmatpush1.msra.mxu0 0.0
    %617 = vmatprep.subr.mxu0 0.0
    %618 = vmatpush1.msra.mxu0 0.0
    %619 = vmatprep.subr.mxu0 0.0
    %620 = vmatpush1.msra.mxu0 0.0
    %621 = vmatprep.subr.mxu0 0.0
    %622 = vmatpush1.msra.mxu0 0.0
    %623 = vmatprep.subr.mxu0 0.0
    %624 = vmatpush1.msra.mxu0 0.0
    %625 = vmatprep.subr.mxu0 0.0
    %626 = vmatpush1.msra.mxu0 0.0
    %627 = vmatprep.subr.mxu0 0.0
    %628 = vmatpush1.msra.mxu0 0.0
    %629 = vmatprep.subr.mxu0 0.0
    %630 = vmatpush1.msra.mxu0 0.0
    %631 = vmatprep.subr.mxu0 0.0
    %632 = vmatpush1.msra.mxu0 0.0
    %633 = vmatprep.subr.mxu0 0.0
    %634 = vmatpush1.msra.mxu0 0.0
    %635 = vmatprep.subr.mxu0 0.0
    %636 = vmatpush1.msra.mxu0 0.0
    %637 = vmatprep.subr.mxu0 0.0
    %638 = vmatpush1.msra.mxu0 0.0
    %639 = vmatprep.subr.mxu0 0.0
    %640 = vmatpush1.msra.mxu0 0.0
    %641 = vmatprep.subr.mxu0 0.0
    %642 = vmatpush1.msra.mxu0 0.0
    %643 = vmatprep.mubr.f32.mxu0 0.0
    %644 = vmatmul.mubr.f32.gmra.mrb[0].mxu0 %v577
    %v645 = vpop.f32.mrb[0].mxu0
    %v646 = vadd.f32 0.0, %v645
    %v647 = vpop.f32.mrb[0].mxu0
    %648 = vdwg.mxu0
    %v649 = vmul.f32 %v404, %v404
    %v650 = vsub.f32 1.0, %v649
    %v651 = vmul.f32 %v646, %v650
    %v653 = vsel %vm330, %v651, 0
    %655 = vmatprep.subr.mxu0 0.0
    %656 = vmatpush1.msra.mxu0 %v209
    %657 = vmatprep.subr.mxu0 0.0
    %658 = vmatpush1.msra.mxu0 %v210
    %659 = vmatprep.subr.mxu0 0.0
    %660 = vmatpush1.msra.mxu0 %v211
    %661 = vmatprep.subr.mxu0 0.0
    %662 = vmatpush1.msra.mxu0 %v212
    %663 = vmatprep.subr.mxu0 0.0
    %664 = vmatpush1.msra.mxu0 0.0
    %665 = vmatprep.subr.mxu0 0.0
    %666 = vmatpush1.msra.mxu0 0.0
    %667 = vmatprep.subr.mxu0 0.0
    %668 = vmatpush1.msra.mxu0 0.0
    %669 = vmatprep.subr.mxu0 0.0
    %670 = vmatpush1.msra.mxu0 0.0
    %671 = vmatprep.subr.mxu0 0.0
    %672 = vmatpush1.msra.mxu0 0.0
    %673 = vmatprep.subr.mxu0 0.0
    %674 = vmatpush1.msra.mxu0 0.0
    %675 = vmatprep.subr.mxu0 0.0
    %676 = vmatpush1.msra.mxu0 0.0
    %677 = vmatprep.subr.mxu0 0.0
    %678 = vmatpush1.msra.mxu0 0.0
    %679 = vmatprep.subr.mxu0 0.0
    %680 = vmatpush1.msra.mxu0 0.0
    %681 = vmatprep.subr.mxu0 0.0
    %682 = vmatpush1.msra.mxu0 0.0
    %683 = vmatprep.subr.mxu0 0.0
    %684 = vmatpush1.msra.mxu0 0.0
    %685 = vmatprep.subr.mxu0 0.0
    %686 = vmatpush1.msra.mxu0 0.0
    %687 = vmatprep.subr.mxu0 0.0
    %688 = vmatpush1.msra.mxu0 0.0
    %689 = vmatprep.subr.mxu0 0.0
    %690 = vmatpush1.msra.mxu0 0.0
    %691 = vmatprep.subr.mxu0 0.0
    %692 = vmatpush1.msra.mxu0 0.0
    %693 = vmatprep.subr.mxu0 0.0
    %694 = vmatpush1.msra.mxu0 0.0
    %695 = vmatprep.subr.mxu0 0.0
    %696 = vmatpush1.msra.mxu0 0.0
    %697 = vmatprep.subr.mxu0 0.0
    %698 = vmatpush1.msra.mxu0 0.0
    %699 = vmatprep.subr.mxu0 0.0
    %700 = vmatpush1.msra.mxu0 0.0
    %701 = vmatprep.subr.mxu0 0.0
    %702 = vmatpush1.msra.mxu0 0.0
    %703 = vmatprep.subr.mxu0 0.0
    %704 = vmatpush1.msra.mxu0 0.0
    %705 = vmatprep.subr.mxu0 0.0
    %706 = vmatpush1.msra.mxu0 0.0
    %707 = vmatprep.subr.mxu0 0.0
    %708 = vmatpush1.msra.mxu0 0.0
    %709 = vmatprep.subr.mxu0 0.0
    %710 = vmatpush1.msra.mxu0 0.0
    %711 = vmatprep.subr.mxu0 0.0
    %712 = vmatpush1.msra.mxu0 0.0
    %713 = vmatprep.subr.mxu0 0.0
    %714 = vmatpush1.msra.mxu0 0.0
    %715 = vmatprep.subr.mxu0 0.0
    %716 = vmatpush1.msra.mxu0 0.0
    %717 = vmatprep.subr.mxu0 0.0
    %718 = vmatpush1.msra.mxu0 0.0
    %719 = vmatprep.mubr.f32.mxu0 0.0
    %720 = vmatmul.mubr.f32.gmra.mrb[0].mxu0 %v653
    %v721 = vpop.f32.mrb[0].mxu0
    %v722 = vadd.f32 0.0, %v721
    %v723 = vpop.f32.mrb[0].mxu0
    %724 = vdwg.mxu0
    %v725 = vmul.f32 %v323, %v323
    %v726 = vsub.f32 1.0, %v725
    %v727 = vmul.f32 %v722, %v726
    %v729 = vlaneseq
    %v730 = vshrl.u32 %v729, 7
    %v731 = vsub.s32 0, %v730
    %v732 = vrot.slane %v223, %v731
    %v734 = vmul.f32 %v566, %v566
    %v735 = vsub.f32 1.0, %v734
    %v736 = vmul.f32 %v732, %v735
    %v738 = vsel %vm493, %v736, 0
    %740 = vmatprep.subr.mxu0 0.0
    %741 = vmatpush1.msra.mxu0 %v221
    %742 = vmatprep.subr.mxu0 0.0
    %743 = vmatpush1.msra.mxu0 %v222
    %744 = vmatprep.subr.mxu0 0.0
    %745 = vmatpush1.msra.mxu0 0.0
    %746 = vmatprep.subr.mxu0 0.0
    %747 = vmatpush1.msra.mxu0 0.0
    %748 = vmatprep.subr.mxu0 0.0
    %749 = vmatpush1.msra.mxu0 0.0
    %750 = vmatprep.subr.mxu0 0.0
    %751 = vmatpush1.msra.mxu0 0.0
    %752 = vmatprep.subr.mxu0 0.0
    %753 = vmatpush1.msra.mxu0 0.0
    %754 = vmatprep.subr.mxu0 0.0
    %755 = vmatpush1.msra.mxu0 0.0
    %756 = vmatprep.subr.mxu0 0.0
    %757 = vmatpush1.msra.mxu0 0.0
    %758 = vmatprep.subr.mxu0 0.0
    %759 = vmatpush1.msra.mxu0 0.0
    %760 = vmatprep.subr.mxu0 0.0
    %761 = vmatpush1.msra.mxu0 0.0
    %762 = vmatprep.subr.mxu0 0.0
    %763 = vmatpush1.msra.mxu0 0.0
    %764 = vmatprep.subr.mxu0 0.0
    %765 = vmatpush1.msra.mxu0 0.0
    %766 = vmatprep.subr.mxu0 0.0
    %767 = vmatpush1.msra.mxu0 0.0
    %768 = vmatprep.subr.mxu0 0.0
    %769 = vmatpush1.msra.mxu0 0.0
    %770 = vmatprep.subr.mxu0 0.0
    %771 = vmatpush1.msra.mxu0 0.0
    %772 = vmatprep.subr.mxu0 0.0
    %773 = vmatpush1.msra.mxu0 0.0
    %774 = vmatprep.subr.mxu0 0.0
    %775 = vmatpush1.msra.mxu0 0.0
    %776 = vmatprep.subr.mxu0 0.0
    %777 = vmatpush1.msra.mxu0 0.0
    %778 = vmatprep.subr.mxu0 0.0
    %779 = vmatpush1.msra.mxu0 0.0
    %780 = vmatprep.subr.mxu0 0.0
    %781 = vmatpush1.msra.mxu0 0.0
    %782 = vmatprep.subr.mxu0 0.0
    %783 = vmatpush1.msra.mxu0 0.0
    %784 = vmatprep.subr.mxu0 0.0
    %785 = vmatpush1.msra.mxu0 0.0
    %786 = vmatprep.subr.mxu0 0.0
    %787 = vmatpush1.msra.mxu0 0.0
    %788 = vmatprep.subr.mxu0 0.0
    %789 = vmatpush1.msra.mxu0 0.0
    %790 = vmatprep.subr.mxu0 0.0
    %791 = vmatpush1.msra.mxu0 0.0
    %792 = vmatprep.subr.mxu0 0.0
    %793 = vmatpush1.msra.mxu0 0.0
    %794 = vmatprep.subr.mxu0 0.0
    %795 = vmatpush1.msra.mxu0 0.0
    %796 = vmatprep.subr.mxu0 0.0
    %797 = vmatpush1.msra.mxu0 0.0
    %798 = vmatprep.subr.mxu0 0.0
    %799 = vmatpush1.msra.mxu0 0.0
    %800 = vmatprep.subr.mxu0 0.0
    %801 = vmatpush1.msra.mxu0 0.0
    %802 = vmatprep.subr.mxu0 0.0
    %803 = vmatpush1.msra.mxu0 0.0
    %804 = vmatprep.mubr.f32.mxu0 0.0
    %805 = vmatmul.mubr.f32.gmra.mrb[0].mxu0 %v738
    %v806 = vpop.f32.mrb[0].mxu0
    %v807 = vadd.f32 0.0, %v806
    %v808 = vpop.f32.mrb[0].mxu0
    %809 = vdwg.mxu0
    %811 = vrot.lane.b32.xlu0 %v726, 96
    %v812 = vpop.permute.xlu0 %811
    %v814 = vmul.f32 %v807, %v812
    %v816 = vsel %vm330, %v727, 0
    %818 = vmatprep.subr.mxu0 0.0
    %819 = vmatpush1.msra.mxu0 %v224
    %820 = vmatprep.subr.mxu0 0.0
    %821 = vmatpush1.msra.mxu0 %v225
    %822 = vmatprep.subr.mxu0 0.0
    %823 = vmatpush1.msra.mxu0 %v226
    %824 = vmatprep.subr.mxu0 0.0
    %825 = vmatpush1.msra.mxu0 %v227
    %826 = vmatprep.subr.mxu0 0.0
    %827 = vmatpush1.msra.mxu0 0.0
    %828 = vmatprep.subr.mxu0 0.0
    %829 = vmatpush1.msra.mxu0 0.0
    %830 = vmatprep.subr.mxu0 0.0
    %831 = vmatpush1.msra.mxu0 0.0
    %832 = vmatprep.subr.mxu0 0.0
    %833 = vmatpush1.msra.mxu0 0.0
    %834 = vmatprep.subr.mxu0 0.0
    %835 = vmatpush1.msra.mxu0 0.0
    %836 = vmatprep.subr.mxu0 0.0
    %837 = vmatpush1.msra.mxu0 0.0
    %838 = vmatprep.subr.mxu0 0.0
    %839 = vmatpush1.msra.mxu0 0.0
    %840 = vmatprep.subr.mxu0 0.0
    %841 = vmatpush1.msra.mxu0 0.0
    %842 = vmatprep.subr.mxu0 0.0
    %843 = vmatpush1.msra.mxu0 0.0
    %844 = vmatprep.subr.mxu0 0.0
    %845 = vmatpush1.msra.mxu0 0.0
    %846 = vmatprep.subr.mxu0 0.0
    %847 = vmatpush1.msra.mxu0 0.0
    %848 = vmatprep.subr.mxu0 0.0
    %849 = vmatpush1.msra.mxu0 0.0
    %850 = vmatprep.subr.mxu0 0.0
    %851 = vmatpush1.msra.mxu0 0.0
    %852 = vmatprep.subr.mxu0 0.0
    %853 = vmatpush1.msra.mxu0 0.0
    %854 = vmatprep.subr.mxu0 0.0
    %855 = vmatpush1.msra.mxu0 0.0
    %856 = vmatprep.subr.mxu0 0.0
    %857 = vmatpush1.msra.mxu0 0.0
    %858 = vmatprep.subr.mxu0 0.0
    %859 = vmatpush1.msra.mxu0 0.0
    %860 = vmatprep.subr.mxu0 0.0
    %861 = vmatpush1.msra.mxu0 0.0
    %862 = vmatprep.subr.mxu0 0.0
    %863 = vmatpush1.msra.mxu0 0.0
    %864 = vmatprep.subr.mxu0 0.0
    %865 = vmatpush1.msra.mxu0 0.0
    %866 = vmatprep.subr.mxu0 0.0
    %867 = vmatpush1.msra.mxu0 0.0
    %868 = vmatprep.subr.mxu0 0.0
    %869 = vmatpush1.msra.mxu0 0.0
    %870 = vmatprep.subr.mxu0 0.0
    %871 = vmatpush1.msra.mxu0 0.0
    %872 = vmatprep.subr.mxu0 0.0
    %873 = vmatpush1.msra.mxu0 0.0
    %874 = vmatprep.subr.mxu0 0.0
    %875 = vmatpush1.msra.mxu0 0.0
    %876 = vmatprep.subr.mxu0 0.0
    %877 = vmatpush1.msra.mxu0 0.0
    %878 = vmatprep.subr.mxu0 0.0
    %879 = vmatpush1.msra.mxu0 0.0
    %880 = vmatprep.subr.mxu0 0.0
    %881 = vmatpush1.msra.mxu0 0.0
    %882 = vmatprep.mubr.f32.mxu0 0.0
    %883 = vmatmul.mubr.f32.gmra.mrb[0].mxu0 %v816
    %v884 = vpop.f32.mrb[0].mxu0
    %v885 = vadd.f32 0.0, %v884
    %v886 = vpop.f32.mrb[0].mxu0
    %887 = vdwg.mxu0
    %v889 = vsel %vm493, %v814, 0
    %891 = vmatprep.subr.mxu0 0.0
    %892 = vmatpush1.msra.mxu0 %v228
    %893 = vmatprep.subr.mxu0 0.0
    %894 = vmatpush1.msra.mxu0 %v229
    %895 = vmatprep.subr.mxu0 0.0
    %896 = vmatpush1.msra.mxu0 0.0
    %897 = vmatprep.subr.mxu0 0.0
    %898 = vmatpush1.msra.mxu0 0.0
    %899 = vmatprep.subr.mxu0 0.0
    %900 = vmatpush1.msra.mxu0 0.0
    %901 = vmatprep.subr.mxu0 0.0
    %902 = vmatpush1.msra.mxu0 0.0
    %903 = vmatprep.subr.mxu0 0.0
    %904 = vmatpush1.msra.mxu0 0.0
    %905 = vmatprep.subr.mxu0 0.0
    %906 = vmatpush1.msra.mxu0 0.0
    %907 = vmatprep.subr.mxu0 0.0
    %908 = vmatpush1.msra.mxu0 0.0
    %909 = vmatprep.subr.mxu0 0.0
    %910 = vmatpush1.msra.mxu0 0.0
    %911 = vmatprep.subr.mxu0 0.0
    %912 = vmatpush1.msra.mxu0 0.0
    %913 = vmatprep.subr.mxu0 0.0
    %914 = vmatpush1.msra.mxu0 0.0
    %915 = vmatprep.subr.mxu0 0.0
    %916 = vmatpush1.msra.mxu0 0.0
    %917 = vmatprep.subr.mxu0 0.0
    %918 = vmatpush1.msra.mxu0 0.0
    %919 = vmatprep.subr.mxu0 0.0
    %920 = vmatpush1.msra.mxu0 0.0
    %921 = vmatprep.subr.mxu0 0.0
    %922 = vmatpush1.msra.mxu0 0.0
    %923 = vmatprep.subr.mxu0 0.0
    %924 = vmatpush1.msra.mxu0 0.0
    %925 = vmatprep.subr.mxu0 0.0
    %926 = vmatpush1.msra.mxu0 0.0
    %927 = vmatprep.subr.mxu0 0.0
    %928 = vmatpush1.msra.mxu0 0.0
    %929 = vmatprep.subr.mxu0 0.0
    %930 = vmatpush1.msra.mxu0 0.0
    %931 = vmatprep.subr.mxu0 0.0
    %932 = vmatpush1.msra.mxu0 0.0
    %933 = vmatprep.subr.mxu0 0.0
    %934 = vmatpush1.msra.mxu0 0.0
    %935 = vmatprep.subr.mxu0 0.0
    %936 = vmatpush1.msra.mxu0 0.0
    %937 = vmatprep.subr.mxu0 0.0
    %938 = vmatpush1.msra.mxu0 0.0
    %939 = vmatprep.subr.mxu0 0.0
    %940 = vmatpush1.msra.mxu0 0.0
    %941 = vmatprep.subr.mxu0 0.0
    %942 = vmatpush1.msra.mxu0 0.0
    %943 = vmatprep.subr.mxu0 0.0
    %944 = vmatpush1.msra.mxu0 0.0
    %945 = vmatprep.subr.mxu0 0.0
    %946 = vmatpush1.msra.mxu0 0.0
    %947 = vmatprep.subr.mxu0 0.0
    %948 = vmatpush1.msra.mxu0 0.0
    %949 = vmatprep.subr.mxu0 0.0
    %950 = vmatpush1.msra.mxu0 0.0
    %951 = vmatprep.subr.mxu0 0.0
    %952 = vmatpush1.msra.mxu0 0.0
    %953 = vmatprep.subr.mxu0 0.0
    %954 = vmatpush1.msra.mxu0 0.0
    %955 = vmatprep.mubr.f32.mxu0 0.0
    %956 = vmatmul.mubr.f32.gmra.mrb[0].mxu0 %v889
    %v957 = vpop.f32.mrb[0].mxu0
    %v958 = vadd.f32 0.0, %v957
    %v959 = vpop.f32.mrb[0].mxu0
    %960 = vdwg.mxu0
    %v961 = vmul.f32 %v885, %v958
    %vm962 = vcmask 523264
    %v964 = vsel %vm962, %v961, 0
    %966 = vmatprep.subr.mxu0 0.0
    %967 = vmatpush1.msra.mxu0 %v230
    %968 = vmatprep.subr.mxu0 0.0
    %969 = vmatpush1.msra.mxu0 %v231
    %970 = vmatprep.subr.mxu0 0.0
    %971 = vmatpush1.msra.mxu0 %v232
    %972 = vmatprep.subr.mxu0 0.0
    %973 = vmatpush1.msra.mxu0 %v233
    %974 = vmatprep.subr.mxu0 0.0
    %975 = vmatpush1.msra.mxu0 %v234
    %976 = vmatprep.subr.mxu0 0.0
    %977 = vmatpush1.msra.mxu0 %v235
    %978 = vmatprep.subr.mxu0 0.0
    %979 = vmatpush1.msra.mxu0 %v236
    %980 = vmatprep.subr.mxu0 0.0
    %981 = vmatpush1.msra.mxu0 %v237
    %982 = vmatprep.subr.mxu0 0.0
    %983 = vmatpush1.msra.mxu0 0.0
    %984 = vmatprep.subr.mxu0 0.0
    %985 = vmatpush1.msra.mxu0 0.0
    %986 = vmatprep.subr.mxu0 0.0
    %987 = vmatpush1.msra.mxu0 0.0
    %988 = vmatprep.subr.mxu0 0.0
    %989 = vmatpush1.msra.mxu0 0.0
    %990 = vmatprep.subr.mxu0 0.0
    %991 = vmatpush1.msra.mxu0 0.0
    %992 = vmatprep.subr.mxu0 0.0
    %993 = vmatpush1.msra.mxu0 0.0
    %994 = vmatprep.subr.mxu0 0.0
    %995 = vmatpush1.msra.mxu0 0.0
    %996 = vmatprep.subr.mxu0 0.0
    %997 = vmatpush1.msra.mxu0 0.0
    %998 = vmatprep.subr.mxu0 0.0
    %999 = vmatpush1.msra.mxu0 0.0
    %1000 = vmatprep.subr.mxu0 0.0
    %1001 = vmatpush1.msra.mxu0 0.0
    %1002 = vmatprep.subr.mxu0 0.0
    %1003 = vmatpush1.msra.mxu0 0.0
    %1004 = vmatprep.subr.mxu0 0.0
    %1005 = vmatpush1.msra.mxu0 0.0
    %1006 = vmatprep.subr.mxu0 0.0
    %1007 = vmatpush1.msra.mxu0 0.0
    %1008 = vmatprep.subr.mxu0 0.0
    %1009 = vmatpush1.msra.mxu0 0.0
    %1010 = vmatprep.subr.mxu0 0.0
    %1011 = vmatpush1.msra.mxu0 0.0
    %1012 = vmatprep.subr.mxu0 0.0
    %1013 = vmatpush1.msra.mxu0 0.0
    %1014 = vmatprep.subr.mxu0 0.0
    %1015 = vmatpush1.msra.mxu0 0.0
    %1016 = vmatprep.subr.mxu0 0.0
    %1017 = vmatpush1.msra.mxu0 0.0
    %1018 = vmatprep.subr.mxu0 0.0
    %1019 = vmatpush1.msra.mxu0 0.0
    %1020 = vmatprep.subr.mxu0 0.0
    %1021 = vmatpush1.msra.mxu0 0.0
    %1022 = vmatprep.subr.mxu0 0.0
    %1023 = vmatpush1.msra.mxu0 0.0
    %1024 = vmatprep.subr.mxu0 0.0
    %1025 = vmatpush1.msra.mxu0 0.0
    %1026 = vmatprep.subr.mxu0 0.0
    %1027 = vmatpush1.msra.mxu0 0.0
    %1028 = vmatprep.subr.mxu0 0.0
    %1029 = vmatpush1.msra.mxu0 0.0
    %1030 = vmatprep.mubr.f32.mxu0 0.0
    %1031 = vmatmul.mubr.f32.gmra.mrb[0].mxu0 %v964
    %v1032 = vpop.f32.mrb[0].mxu0
    %v1033 = vadd.f32 0.0, %v1032
    %v1034 = vpop.f32.mrb[0].mxu0
    %1035 = vdwg.mxu0
    %1037 = vrot.lane.b32.xlu0 %v1033, 120
    %v1038 = vpop.permute.xlu0 %1037
    %vm1039 = vcmask 31744
    %v1040 = vsel %vm1039, %v1038, 0
    %vm1042 = vcmask 1043456
    %v1044 = vsel %vm1042, %v238, 0
    %1046 = vmatprep.subr.mxu0 0.0
    %1047 = vmatpush1.msra.mxu0 %v1044
    %1048 = vmatprep.subr.mxu0 0.0
    %1049 = vmatpush1.msra.mxu0 0.0
    %1050 = vmatprep.subr.mxu0 0.0
    %1051 = vmatpush1.msra.mxu0 0.0
    %1052 = vmatprep.subr.mxu0 0.0
    %1053 = vmatpush1.msra.mxu0 0.0
    %1054 = vmatprep.subr.mxu0 0.0
    %1055 = vmatpush1.msra.mxu0 0.0
    %1056 = vmatprep.subr.mxu0 0.0
    %1057 = vmatpush1.msra.mxu0 0.0
    %1058 = vmatprep.subr.mxu0 0.0
    %1059 = vmatpush1.msra.mxu0 0.0
    %1060 = vmatprep.subr.mxu0 0.0
    %1061 = vmatpush1.msra.mxu0 0.0
    %1062 = vmatprep.subr.mxu0 0.0
    %1063 = vmatpush1.msra.mxu0 0.0
    %1064 = vmatprep.subr.mxu0 0.0
    %1065 = vmatpush1.msra.mxu0 0.0
    %1066 = vmatprep.subr.mxu0 0.0
    %1067 = vmatpush1.msra.mxu0 0.0
    %1068 = vmatprep.subr.mxu0 0.0
    %1069 = vmatpush1.msra.mxu0 0.0
    %1070 = vmatprep.subr.mxu0 0.0
    %1071 = vmatpush1.msra.mxu0 0.0
    %1072 = vmatprep.subr.mxu0 0.0
    %1073 = vmatpush1.msra.mxu0 0.0
    %1074 = vmatprep.subr.mxu0 0.0
    %1075 = vmatpush1.msra.mxu0 0.0
    %1076 = vmatprep.subr.mxu0 0.0
    %1077 = vmatpush1.msra.mxu0 0.0
    %1078 = vmatprep.subr.mxu0 0.0
    %1079 = vmatpush1.msra.mxu0 0.0
    %1080 = vmatprep.subr.mxu0 0.0
    %1081 = vmatpush1.msra.mxu0 0.0
    %1082 = vmatprep.subr.mxu0 0.0
    %1083 = vmatpush1.msra.mxu0 0.0
    %1084 = vmatprep.subr.mxu0 0.0
    %1085 = vmatpush1.msra.mxu0 0.0
    %1086 = vmatprep.subr.mxu0 0.0
    %1087 = vmatpush1.msra.mxu0 0.0
    %1088 = vmatprep.subr.mxu0 0.0
    %1089 = vmatpush1.msra.mxu0 0.0
    %1090 = vmatprep.subr.mxu0 0.0
    %1091 = vmatpush1.msra.mxu0 0.0
    %1092 = vmatprep.subr.mxu0 0.0
    %1093 = vmatpush1.msra.mxu0 0.0
    %1094 = vmatprep.subr.mxu0 0.0
    %1095 = vmatpush1.msra.mxu0 0.0
    %1096 = vmatprep.subr.mxu0 0.0
    %1097 = vmatpush1.msra.mxu0 0.0
    %1098 = vmatprep.subr.mxu0 0.0
    %1099 = vmatpush1.msra.mxu0 0.0
    %1100 = vmatprep.subr.mxu0 0.0
    %1101 = vmatpush1.msra.mxu0 0.0
    %1102 = vmatprep.subr.mxu0 0.0
    %1103 = vmatpush1.msra.mxu0 0.0
    %1104 = vmatprep.subr.mxu0 0.0
    %1105 = vmatpush1.msra.mxu0 0.0
    %1106 = vmatprep.subr.mxu0 0.0
    %1107 = vmatpush1.msra.mxu0 0.0
    %1108 = vmatprep.subr.mxu0 0.0
    %1109 = vmatpush1.msra.mxu0 0.0
    %1110 = vmatprep.mubr.f32.mxu0 0.0
    %1111 = vmatmul.mubr.f32.gmra.mrb[0].mxu0 %v1040
    %v1112 = vpop.f32.mrb[0].mxu0
    %v1113 = vadd.f32 0.0, %v1112
    %v1114 = vpop.f32.mrb[0].mxu0
    %1115 = vdwg.mxu0
    %1117 = vrot.lane.b32.xlu0 %v1113, 64
    %v1118 = vpop.permute.xlu0 %1117
    %v1120 = vmul.f32 %v885, %v1118
    %1122 = vrot.lane.b32.xlu0 %v1120, 64
    %v1123 = vpop.permute.xlu0 %1122
    %v1124 = vsel %vm330, %v1123, 0
    %1126 = vmatprep.subr.mxu0 0.0
    %1127 = vmatpush1.msra.mxu0 %v239
    %1128 = vmatprep.subr.mxu0 0.0
    %1129 = vmatpush1.msra.mxu0 %v240
    %1130 = vmatprep.subr.mxu0 0.0
    %1131 = vmatpush1.msra.mxu0 %v241
    %1132 = vmatprep.subr.mxu0 0.0
    %1133 = vmatpush1.msra.mxu0 %v242
    %1134 = vmatprep.subr.mxu0 0.0
    %1135 = vmatpush1.msra.mxu0 0.0
    %1136 = vmatprep.subr.mxu0 0.0
    %1137 = vmatpush1.msra.mxu0 0.0
    %1138 = vmatprep.subr.mxu0 0.0
    %1139 = vmatpush1.msra.mxu0 0.0
    %1140 = vmatprep.subr.mxu0 0.0
    %1141 = vmatpush1.msra.mxu0 0.0
    %1142 = vmatprep.subr.mxu0 0.0
    %1143 = vmatpush1.msra.mxu0 0.0
    %1144 = vmatprep.subr.mxu0 0.0
    %1145 = vmatpush1.msra.mxu0 0.0
    %1146 = vmatprep.subr.mxu0 0.0
    %1147 = vmatpush1.msra.mxu0 0.0
    %1148 = vmatprep.subr.mxu0 0.0
    %1149 = vmatpush1.msra.mxu0 0.0
    %1150 = vmatprep.subr.mxu0 0.0
    %1151 = vmatpush1.msra.mxu0 0.0
    %1152 = vmatprep.subr.mxu0 0.0
    %1153 = vmatpush1.msra.mxu0 0.0
    %1154 = vmatprep.subr.mxu0 0.0
    %1155 = vmatpush1.msra.mxu0 0.0
    %1156 = vmatprep.subr.mxu0 0.0
    %1157 = vmatpush1.msra.mxu0 0.0
    %1158 = vmatprep.subr.mxu0 0.0
    %1159 = vmatpush1.msra.mxu0 0.0
    %1160 = vmatprep.subr.mxu0 0.0
    %1161 = vmatpush1.msra.mxu0 0.0
    %1162 = vmatprep.subr.mxu0 0.0
    %1163 = vmatpush1.msra.mxu0 0.0
    %1164 = vmatprep.subr.mxu0 0.0
    %1165 = vmatpush1.msra.mxu0 0.0
    %1166 = vmatprep.subr.mxu0 0.0
    %1167 = vmatpush1.msra.mxu0 0.0
    %1168 = vmatprep.subr.mxu0 0.0
    %1169 = vmatpush1.msra.mxu0 0.0
    %1170 = vmatprep.subr.mxu0 0.0
    %1171 = vmatpush1.msra.mxu0 0.0
    %1172 = vmatprep.subr.mxu0 0.0
    %1173 = vmatpush1.msra.mxu0 0.0
    %1174 = vmatprep.subr.mxu0 0.0
    %1175 = vmatpush1.msra.mxu0 0.0
    %1176 = vmatprep.subr.mxu0 0.0
    %1177 = vmatpush1.msra.mxu0 0.0
    %1178 = vmatprep.subr.mxu0 0.0
    %1179 = vmatpush1.msra.mxu0 0.0
    %1180 = vmatprep.subr.mxu0 0.0
    %1181 = vmatpush1.msra.mxu0 0.0
    %1182 = vmatprep.subr.mxu0 0.0
    %1183 = vmatpush1.msra.mxu0 0.0
    %1184 = vmatprep.subr.mxu0 0.0
    %1185 = vmatpush1.msra.mxu0 0.0
    %1186 = vmatprep.subr.mxu0 0.0
    %1187 = vmatpush1.msra.mxu0 0.0
    %1188 = vmatprep.subr.mxu0 0.0
    %1189 = vmatpush1.msra.mxu0 0.0
    %1190 = vmatprep.mubr.f32.mxu0 0.0
    %1191 = vmatmul.mubr.f32.gmra.mrb[0].mxu0 %v1124
    %v1192 = vpop.f32.mrb[0].mxu0
    %v1193 = vadd.f32 0.0, %v1192
    %v1194 = vpop.f32.mrb[0].mxu0
    %1195 = vdwg.mxu0
    %v1196 = vadd.f32 %v1033, %v1193
    %1197 = vst.msk [vmem:[#allocation20] sm:$0xff] %vm249, %v1196
    // Predicated region
    $region122: #{_rhs.1} parent=1 // pred_check
      _
    $region123: #{_rhs.1} parent=1 // pred_check_branch
      %1199 = sbr.rel (0) target = $region125
    $region124: #{_rhs.1} parent=1 // pred_region
      %s1201 = ssub.s32 128, 128
      %1202 = vsyncadd [#allocation4], %s1201
      %s1204 = sshll.u32 [#allocation20], 4
      %s1205 = int_to_ptr.vmem [resolvable:$true] %s1204
      %1207 = dma.vmem_to_hbm [thread:$0]  %s1205, 128, %s19, [#allocation4]
    $region125: #{_rhs.1} parent=1 // pred_fallthru
      _
    // Predicated region
    $region126: #{_rhs.1} parent=1 // pred_check
      _
    $region127: #{_rhs.1} parent=1 // pred_check_branch
      %1209 = sbr.rel (0) target = $region129
    $region128: #{_rhs.1} parent=1 // pred_region
      %1210 = dma.done [#allocation4], 128
    $region129: #{_rhs.1} parent=1 // pred_fallthru
      _
    %1211 = vsyncpa [#allocation3], 1
    %1212 = vsyncpa [#allocation6], 1
    %1213 = vsyncpa [#allocation9], 1
    %1214 = vsyncpa [#allocation12], 1
    %1215 = vsyncpa [#allocation15], 1
    %1216 = vsyncpa [#allocation18], 1
    %1217 = vsyncpa [#allocation4], 1

</llo_original>
